<compile_context>
chip_gen: v7x
topology: tpu7x:2x2x1
jax: 0.10.0
libtpu: 0.0.40
codegen_flags: <defaults>
</compile_context>

<pallas_src>
import jax
import jax.numpy as jnp
from jax.experimental import pallas as pl
from jax.experimental.pallas import tpu as pltpu

# Model hyper-parameters (small but faithful to the module's structure).
D = 8                 # number of pts_linears layers
W = 32                # hidden width
INPUT_CH = 3          # xyz
INPUT_CH_VIEWS = 3    # view direction
OUTPUT_CH = 4         # alpha_linear output channels (rgb[3] + alpha[1])
OUT_DIM = 3 + (OUTPUT_CH - 3) + 3   # cat([rgb, alpha, rgb_res]) = 7
IN_DIM = INPUT_CH + INPUT_CH_VIEWS  # 6
ROW_ALIGN = 16        # packed-row alignment (covers f32 (8) and bf16 (16) sublane tiles)


def nerf_kernel(x_ref, w0_ref, b0_ref, wvv_ref, bvv_ref,
                wrest_ref, brest_ref, wfv0_ref, wvl1_ref, bvl1_ref,
                wfa_ref, bfa_ref, wout_ref, bout_ref, out_ref):
    """All activations are row-packed: lane group k holds batch row 4r+k (or 8r+k)."""
    f32 = jnp.float32
    relu = lambda v: jnp.maximum(v, 0.0)

    x = x_ref[...]                    # [rows, g*6]
    cd = x.dtype                      # compute dtype (f32 or bf16)

    # Stage 1 (two dots sharing the raw-input LHS):
    #   h     = relu(pts @ w0 + b0)                      -> [rows, g*W]
    #   vterm = views @ (wv @ wvl0[W:]) + folded bias     -> [rows, g*W//2]
    h = relu(jnp.dot(x, w0_ref[...], preferred_element_type=f32)
             + b0_ref[...]).astype(cd)
    vterm = jnp.dot(x, wvv_ref[...], preferred_element_type=f32) + bvv_ref[...]

    # Remaining pts_linears layers (skips=[] -> all Linear(W, W)), g x block-diag.
    for i in range(wrest_ref.shape[0]):
        h = relu(jnp.dot(h, wrest_ref[i], preferred_element_type=f32)
                 + brest_ref[i]).astype(cd)

    # views branch: feature_linear folded into views_linears[0] at pack time.
    h2 = relu(jnp.dot(h, wfv0_ref[...], preferred_element_type=f32)
              + vterm).astype(cd)
    h2 = relu(jnp.dot(h2, wvl1_ref[...], preferred_element_type=f32)
              + bvl1_ref[...]).astype(cd)

    # Output assembly (per row: [rgb_res+rgb, alpha, rgb_res]) as the sum of two
    # dots whose weights were padded/replicated at pack time -> one dense store.
    out = (jnp.dot(h, wfa_ref[...], preferred_element_type=f32) + bfa_ref[...]
           + jnp.dot(h2, wout_ref[...], preferred_element_type=f32) + bout_ref[...])
    out_ref[...] = out.astype(out_ref.dtype)


def _full_spec(arr):
    nd = arr.ndim
    return pl.BlockSpec(arr.shape, lambda i, nd=nd: (0,) * nd)


def _round_up(n, m):
    return ((n + m - 1) // m) * m


def pack_params(p, *, group=4, dtype=jnp.float32):
    """Pack raw params into the 13 row-packed kernel operands (done once).

    group=4 -> 128-lane activations (fits v5e/v6e/v7x); group=8 -> 256-lane
    activations to fill the 256-wide v6e/v7x MXU.  dtype=jnp.bfloat16 for native
    MXU throughput on v6e/v7x (biases stay f32; accumulation is f32).
    """
    f32 = jnp.float32
    g = group

    def blockdiag(w):
        cin, cout = w.shape
        out = jnp.zeros((g * cin, g * cout), f32)
        for k in range(g):
            out = out.at[k * cin:(k + 1) * cin, k * cout:(k + 1) * cout].set(w)
        return out

    def tile_b(b):                       # [1, c] -> [1, g*c] (same bias per row group)
        return jnp.tile(b, (1, g))

    # --- per-row fused weights (f32 composition, cast once at the end) ---
    # pts_linears[0] lifted to act on the raw 6-wide input (zeros on view dims).
    w0_row = jnp.zeros((IN_DIM, W), f32).at[:INPUT_CH, :].set(p["w0"])
    # view_linear composed with views_linears[0][W:, :]; lifted to the raw input.
    wvv = p["wv"] @ p["wvl0"][W:, :]                                  # [3, W//2]
    wvv_row = jnp.zeros((IN_DIM, W // 2), f32).at[INPUT_CH:, :].set(wvv)
    # combined pre-activation bias of views_linears[0] after folding.
    bvv_row = p["bf"] @ p["wvl0"][:W, :] + p["bv"] @ p["wvl0"][W:, :] + p["bvl0"]
    # feature_linear composed with views_linears[0][:W, :].
    wfv0_row = p["wf"] @ p["wvl0"][:W, :]                             # [W, W//2]
    # alpha_linear head -> 7 output channels per row: [rgb(3), alpha(1), 0, 0, 0].
    wfa_row = jnp.concatenate([p["wa"], jnp.zeros((W, 3), f32)], axis=-1)
    bfa_row = jnp.concatenate([p["ba"], jnp.zeros((1, 3), f32)], axis=-1)
    # rgb_linear head -> 7 output channels per row: [rgb_res(3), 0, rgb_res(3)].
    wout_row = jnp.concatenate([p["wrgb"], jnp.zeros((W // 2, 1), f32), p["wrgb"]], axis=-1)
    bout_row = jnp.concatenate([p["brgb"], jnp.zeros((1, 1), f32), p["brgb"]], axis=-1)

    w0p = blockdiag(w0_row).astype(dtype)
    b0p = tile_b(p["b0"])
    wvvp = blockdiag(wvv_row).astype(dtype)
    bvvp = tile_b(bvv_row)
    wrestp = jnp.stack([blockdiag(p["wrest"][i]) for i in range(D - 1)]).astype(dtype)
    brestp = jnp.stack([tile_b(p["brest"][i]) for i in range(D - 1)])
    wfv0p = blockdiag(wfv0_row).astype(dtype)
    wvl1p = blockdiag(p["wvl1"]).astype(dtype)
    bvl1p = tile_b(p["bvl1"])
    wfap = blockdiag(wfa_row).astype(dtype)
    bfap = tile_b(bfa_row)
    woutp = blockdiag(wout_row).astype(dtype)
    boutp = tile_b(bout_row)
    return (w0p, b0p, wvvp, bvvp, wrestp, brestp, wfv0p,
            wvl1p, bvl1p, wfap, bfap, woutp, boutp)


def nerf_forward(x, packed, *, tile_rows=1024, min_tiles=2):
    """x: [N, 6] float32 -> [N, 7] float32.

    `packed` comes from pack_params(); group size and compute dtype are inferred
    from it.  tile_rows is in packed rows (1 packed row = `group` batch rows).
    """
    N = x.shape[0]
    group = packed[0].shape[0] // IN_DIM
    cd = packed[0].dtype

    rows = pl.cdiv(N, group)                       # packed rows needed
    # Minimal-padding tile selection; force >= min_tiles grid steps when possible
    # so the "parallel" axis can shard across v7x's two TensorCores.
    nt = max(pl.cdiv(rows, tile_rows), min(min_tiles, pl.cdiv(rows, ROW_ALIGN)))
    tr = _round_up(pl.cdiv(rows, nt), ROW_ALIGN)
    nt = pl.cdiv(rows, tr)
    rows_p = nt * tr
    Np = rows_p * group

    xp = x.astype(cd)
    if Np != N:
        xp = jnp.pad(xp, ((0, Np - N), (0, 0)))
    xp = xp.reshape(rows_p, group * IN_DIM)        # row-major row packing

    in_specs = [pl.BlockSpec((tr, group * IN_DIM), lambda i: (i, 0))]
    in_specs += [_full_spec(w) for w in packed]    # constant maps -> VMEM resident
    out_specs = pl.BlockSpec((tr, group * OUT_DIM), lambda i: (i, 0))

    out = pl.pallas_call(
        nerf_kernel,
        out_shape=jax.ShapeDtypeStruct((rows_p, group * OUT_DIM), jnp.float32),
        grid_spec=pltpu.PrefetchScalarGridSpec(
            num_scalar_prefetch=0,
            grid=(nt,),
            in_specs=in_specs,
            out_specs=out_specs,
        ),
        compiler_params=pltpu.CompilerParams(
            dimension_semantics=("parallel",),
            vmem_limit_bytes=32 * 1024 * 1024),
    )(xp, *packed)

    out = out.reshape(Np, OUT_DIM)
    return out[:N] if Np != N else out


def init_params(key):
    """Deterministic PyTorch-style (uniform +/-1/sqrt(fan_in)) init; weights [in, out]."""
    def lin(k, fan_in, fan_out):
        kw, kb = jax.random.split(k)
        bound = 1.0 / jnp.sqrt(jnp.float32(fan_in))
        w = jax.random.uniform(kw, (fan_in, fan_out), jnp.float32, -bound, bound)
        b = jax.random.uniform(kb, (1, fan_out), jnp.float32, -bound, bound)
        return w, b

    keys = jax.random.split(key, D + 6)
    p = {}
    p["w0"], p["b0"] = lin(keys[0], INPUT_CH, W)
    wrest, brest = [], []
    for i in range(D - 1):
        w, b = lin(keys[1 + i], W, W)
        wrest.append(w)
        brest.append(b)
    p["wrest"] = jnp.stack(wrest)            # [D-1, W, W]
    p["brest"] = jnp.stack(brest)            # [D-1, 1, W]
    p["wa"], p["ba"] = lin(keys[D], W, OUTPUT_CH)            # alpha_linear
    p["wf"], p["bf"] = lin(keys[D + 1], W, W)                # feature_linear
    p["wv"], p["bv"] = lin(keys[D + 2], INPUT_CH_VIEWS, W)   # view_linear
    p["wvl0"], p["bvl0"] = lin(keys[D + 3], 2 * W, W // 2)   # views_linears[0]
    p["wvl1"], p["bvl1"] = lin(keys[D + 4], W // 2, W // 2)  # views_linears[1]
    p["wrgb"], p["brgb"] = lin(keys[D + 5], W // 2, 3)       # rgb_linear
    return p


def nerf_reference(x, p):
    """Pure-JAX reference (mirrors the PyTorch forward with the same config)."""
    relu = lambda v: jnp.maximum(v, 0.0)
    pts = x[:, :INPUT_CH]
    views = x[:, INPUT_CH:IN_DIM]
    h = relu(pts @ p["w0"] + p["b0"])
    for i in range(D - 1):
        h = relu(h @ p["wrest"][i] + p["brest"][i])
    outputs = h @ p["wa"] + p["ba"]
    rgb, alpha = outputs[:, :3], outputs[:, 3:]
    feature = h @ p["wf"] + p["bf"]
    view_feature = views @ p["wv"] + p["bv"]
    h2 = jnp.concatenate([feature, view_feature], axis=-1)
    h2 = relu(h2 @ p["wvl0"] + p["bvl0"])
    h2 = relu(h2 @ p["wvl1"] + p["bvl1"])
    rgb_res = h2 @ p["wrgb"] + p["brgb"]
    rgb = rgb_res + rgb
    return jnp.concatenate([rgb, alpha, rgb_res], axis=-1)


if __name__ == "__main__":
    key = jax.random.PRNGKey(0)
    kx, kp = jax.random.split(key)

    N = 64
    x = jax.random.normal(kx, (N, IN_DIM), jnp.float32)
    params = init_params(kp)
    ref = nerf_reference(x, params)

    # f32, 4 rows per lane-row (128-lane activations; works on v5e/v6e/v7x).
    packed_f32 = pack_params(params, group=4, dtype=jnp.float32)
    out = jax.block_until_ready(nerf_forward(x, packed_f32))
    assert out.shape == (N, OUT_DIM), out.shape
    err = float(jnp.max(jnp.abs(out - ref)))
    assert err < 1e-4, err          # linear folding changes f32 summation order

    # bf16 weights/activations, 8 rows per lane-row (256-lane, for v6e/v7x MXU).
    packed_bf16 = pack_params(params, group=8, dtype=jnp.bfloat16)
    out2 = jax.block_until_ready(nerf_forward(x, packed_bf16))
    assert out2.shape == (N, OUT_DIM), out2.shape
    err2 = float(jnp.max(jnp.abs(out2 - ref)))
    assert err2 < 5e-2, err2        # bf16 rounding tolerance

    print("KERNEL_OK")
</pallas_src>

<mosaic_0001>
module attributes {stable_mosaic.version = 11 : i64} {
  func.func @nerf_kernel(%arg0: i32, %arg1: memref<16x24xf32, #tpu.memory_space<vmem>>, %arg2: memref<24x128xf32, #tpu.memory_space<vmem>>, %arg3: memref<1x128xf32, #tpu.memory_space<vmem>>, %arg4: memref<24x64xf32, #tpu.memory_space<vmem>>, %arg5: memref<1x64xf32, #tpu.memory_space<vmem>>, %arg6: memref<7x128x128xf32, #tpu.memory_space<vmem>>, %arg7: memref<7x1x128xf32, #tpu.memory_space<vmem>>, %arg8: memref<128x64xf32, #tpu.memory_space<vmem>>, %arg9: memref<64x64xf32, #tpu.memory_space<vmem>>, %arg10: memref<1x64xf32, #tpu.memory_space<vmem>>, %arg11: memref<128x28xf32, #tpu.memory_space<vmem>>, %arg12: memref<1x28xf32, #tpu.memory_space<vmem>>, %arg13: memref<64x28xf32, #tpu.memory_space<vmem>>, %arg14: memref<1x28xf32, #tpu.memory_space<vmem>>, %arg15: memref<16x28xf32, #tpu.memory_space<vmem>>) attributes {dimension_semantics = [#tpu.dimension_semantics<parallel>], iteration_bounds = array<i64: 1>, scalar_prefetch = 0 : i64, scratch_operands = 0 : i64, tpu.core_type = #tpu.core_type<tc>, window_params = [{transform_indices = @transform_0, window_bounds = array<i64: 16, 24>}, {pipeline_mode = #tpu.pipeline_mode<synchronous>, transform_indices = @transform_1, window_bounds = array<i64: 24, 128>}, {pipeline_mode = #tpu.pipeline_mode<synchronous>, transform_indices = @transform_2, window_bounds = array<i64: 1, 128>}, {pipeline_mode = #tpu.pipeline_mode<synchronous>, transform_indices = @transform_3, window_bounds = array<i64: 24, 64>}, {pipeline_mode = #tpu.pipeline_mode<synchronous>, transform_indices = @transform_4, window_bounds = array<i64: 1, 64>}, {pipeline_mode = #tpu.pipeline_mode<synchronous>, transform_indices = @transform_5, window_bounds = array<i64: 7, 128, 128>}, {pipeline_mode = #tpu.pipeline_mode<synchronous>, transform_indices = @transform_6, window_bounds = array<i64: 7, 1, 128>}, {pipeline_mode = #tpu.pipeline_mode<synchronous>, transform_indices = @transform_7, window_bounds = array<i64: 128, 64>}, {pipeline_mode = #tpu.pipeline_mode<synchronous>, transform_indices = @transform_8, window_bounds = array<i64: 64, 64>}, {pipeline_mode = #tpu.pipeline_mode<synchronous>, transform_indices = @transform_9, window_bounds = array<i64: 1, 64>}, {pipeline_mode = #tpu.pipeline_mode<synchronous>, transform_indices = @transform_10, window_bounds = array<i64: 128, 28>}, {pipeline_mode = #tpu.pipeline_mode<synchronous>, transform_indices = @transform_11, window_bounds = array<i64: 1, 28>}, {pipeline_mode = #tpu.pipeline_mode<synchronous>, transform_indices = @transform_12, window_bounds = array<i64: 64, 28>}, {pipeline_mode = #tpu.pipeline_mode<synchronous>, transform_indices = @transform_13, window_bounds = array<i64: 1, 28>}, {transform_indices = @transform_14, window_bounds = array<i64: 16, 28>}]} {
    %c0 = arith.constant 0 : index
    %c0_0 = arith.constant 0 : index
    %0 = vector.load %arg1[%c0, %c0_0] : memref<16x24xf32, #tpu.memory_space<vmem>>, vector<16x24xf32>
    %c0_1 = arith.constant 0 : index
    %c0_2 = arith.constant 0 : index
    %1 = vector.load %arg2[%c0_1, %c0_2] : memref<24x128xf32, #tpu.memory_space<vmem>>, vector<24x128xf32>
    %cst = arith.constant dense<0.000000e+00> : vector<16x128xf32>
    %2 = tpu.matmul %0, %1, %cst {dimension_numbers = #tpu.dot_dimension_numbers<[1], [0], [0], [1], [0, 0, 1, 1], [], []>} : vector<16x24xf32>, vector<24x128xf32>, vector<16x128xf32> -> vector<16x128xf32>
    %c0_3 = arith.constant 0 : index
    %c0_4 = arith.constant 0 : index
    %3 = vector.load %arg3[%c0_3, %c0_4] : memref<1x128xf32, #tpu.memory_space<vmem>>, vector<1x128xf32>
    %4 = vector.broadcast %3 : vector<1x128xf32> to vector<16x128xf32>
    %5 = arith.addf %2, %4 : vector<16x128xf32>
    %cst_5 = arith.constant 0.000000e+00 : f32
    %6 = vector.broadcast %cst_5 : f32 to vector<16x128xf32>
    %7 = arith.maximumf %5, %6 : vector<16x128xf32>
    %c0_6 = arith.constant 0 : index
    %c0_7 = arith.constant 0 : index
    %8 = vector.load %arg4[%c0_6, %c0_7] : memref<24x64xf32, #tpu.memory_space<vmem>>, vector<24x64xf32>
    %cst_8 = arith.constant dense<0.000000e+00> : vector<16x64xf32>
    %9 = tpu.matmul %0, %8, %cst_8 {dimension_numbers = #tpu.dot_dimension_numbers<[1], [0], [0], [1], [0, 0, 1, 1], [], []>} : vector<16x24xf32>, vector<24x64xf32>, vector<16x64xf32> -> vector<16x64xf32>
    %c0_9 = arith.constant 0 : index
    %c0_10 = arith.constant 0 : index
    %10 = vector.load %arg5[%c0_9, %c0_10] : memref<1x64xf32, #tpu.memory_space<vmem>>, vector<1x64xf32>
    %11 = vector.broadcast %10 : vector<1x64xf32> to vector<16x64xf32>
    %12 = arith.addf %9, %11 : vector<16x64xf32>
    %c0_11 = arith.constant 0 : index
    %c0_12 = arith.constant 0 : index
    %c0_13 = arith.constant 0 : index
    %13 = vector.load %arg6[%c0_11, %c0_12, %c0_13] : memref<7x128x128xf32, #tpu.memory_space<vmem>>, vector<1x128x128xf32>
    %14 = vector.shape_cast %13 : vector<1x128x128xf32> to vector<128x128xf32>
    %cst_14 = arith.constant dense<0.000000e+00> : vector<16x128xf32>
    %15 = tpu.matmul %7, %14, %cst_14 {dimension_numbers = #tpu.dot_dimension_numbers<[1], [0], [0], [1], [0, 0, 1, 1], [], []>} : vector<16x128xf32>, vector<128x128xf32>, vector<16x128xf32> -> vector<16x128xf32>
    %c0_15 = arith.constant 0 : index
    %c0_16 = arith.constant 0 : index
    %c0_17 = arith.constant 0 : index
    %16 = vector.load %arg7[%c0_15, %c0_16, %c0_17] : memref<7x1x128xf32, #tpu.memory_space<vmem>>, vector<1x1x128xf32>
    %17 = vector.shape_cast %16 : vector<1x1x128xf32> to vector<1x128xf32>
    %18 = vector.broadcast %17 : vector<1x128xf32> to vector<16x128xf32>
    %19 = arith.addf %15, %18 : vector<16x128xf32>
    %cst_18 = arith.constant 0.000000e+00 : f32
    %20 = vector.broadcast %cst_18 : f32 to vector<16x128xf32>
    %21 = arith.maximumf %19, %20 : vector<16x128xf32>
    %c1 = arith.constant 1 : index
    %c0_19 = arith.constant 0 : index
    %c0_20 = arith.constant 0 : index
    %22 = vector.load %arg6[%c1, %c0_19, %c0_20] : memref<7x128x128xf32, #tpu.memory_space<vmem>>, vector<1x128x128xf32>
    %23 = vector.shape_cast %22 : vector<1x128x128xf32> to vector<128x128xf32>
    %cst_21 = arith.constant dense<0.000000e+00> : vector<16x128xf32>
    %24 = tpu.matmul %21, %23, %cst_21 {dimension_numbers = #tpu.dot_dimension_numbers<[1], [0], [0], [1], [0, 0, 1, 1], [], []>} : vector<16x128xf32>, vector<128x128xf32>, vector<16x128xf32> -> vector<16x128xf32>
    %c1_22 = arith.constant 1 : index
    %c0_23 = arith.constant 0 : index
    %c0_24 = arith.constant 0 : index
    %25 = vector.load %arg7[%c1_22, %c0_23, %c0_24] : memref<7x1x128xf32, #tpu.memory_space<vmem>>, vector<1x1x128xf32>
    %26 = vector.shape_cast %25 : vector<1x1x128xf32> to vector<1x128xf32>
    %27 = vector.broadcast %26 : vector<1x128xf32> to vector<16x128xf32>
    %28 = arith.addf %24, %27 : vector<16x128xf32>
    %cst_25 = arith.constant 0.000000e+00 : f32
    %29 = vector.broadcast %cst_25 : f32 to vector<16x128xf32>
    %30 = arith.maximumf %28, %29 : vector<16x128xf32>
    %c2 = arith.constant 2 : index
    %c0_26 = arith.constant 0 : index
    %c0_27 = arith.constant 0 : index
    %31 = vector.load %arg6[%c2, %c0_26, %c0_27] : memref<7x128x128xf32, #tpu.memory_space<vmem>>, vector<1x128x128xf32>
    %32 = vector.shape_cast %31 : vector<1x128x128xf32> to vector<128x128xf32>
    %cst_28 = arith.constant dense<0.000000e+00> : vector<16x128xf32>
    %33 = tpu.matmul %30, %32, %cst_28 {dimension_numbers = #tpu.dot_dimension_numbers<[1], [0], [0], [1], [0, 0, 1, 1], [], []>} : vector<16x128xf32>, vector<128x128xf32>, vector<16x128xf32> -> vector<16x128xf32>
    %c2_29 = arith.constant 2 : index
    %c0_30 = arith.constant 0 : index
    %c0_31 = arith.constant 0 : index
    %34 = vector.load %arg7[%c2_29, %c0_30, %c0_31] : memref<7x1x128xf32, #tpu.memory_space<vmem>>, vector<1x1x128xf32>
    %35 = vector.shape_cast %34 : vector<1x1x128xf32> to vector<1x128xf32>
    %36 = vector.broadcast %35 : vector<1x128xf32> to vector<16x128xf32>
    %37 = arith.addf %33, %36 : vector<16x128xf32>
    %cst_32 = arith.constant 0.000000e+00 : f32
    %38 = vector.broadcast %cst_32 : f32 to vector<16x128xf32>
    %39 = arith.maximumf %37, %38 : vector<16x128xf32>
    %c3 = arith.constant 3 : index
    %c0_33 = arith.constant 0 : index
    %c0_34 = arith.constant 0 : index
    %40 = vector.load %arg6[%c3, %c0_33, %c0_34] : memref<7x128x128xf32, #tpu.memory_space<vmem>>, vector<1x128x128xf32>
    %41 = vector.shape_cast %40 : vector<1x128x128xf32> to vector<128x128xf32>
    %cst_35 = arith.constant dense<0.000000e+00> : vector<16x128xf32>
    %42 = tpu.matmul %39, %41, %cst_35 {dimension_numbers = #tpu.dot_dimension_numbers<[1], [0], [0], [1], [0, 0, 1, 1], [], []>} : vector<16x128xf32>, vector<128x128xf32>, vector<16x128xf32> -> vector<16x128xf32>
    %c3_36 = arith.constant 3 : index
    %c0_37 = arith.constant 0 : index
    %c0_38 = arith.constant 0 : index
    %43 = vector.load %arg7[%c3_36, %c0_37, %c0_38] : memref<7x1x128xf32, #tpu.memory_space<vmem>>, vector<1x1x128xf32>
    %44 = vector.shape_cast %43 : vector<1x1x128xf32> to vector<1x128xf32>
    %45 = vector.broadcast %44 : vector<1x128xf32> to vector<16x128xf32>
    %46 = arith.addf %42, %45 : vector<16x128xf32>
    %cst_39 = arith.constant 0.000000e+00 : f32
    %47 = vector.broadcast %cst_39 : f32 to vector<16x128xf32>
    %48 = arith.maximumf %46, %47 : vector<16x128xf32>
    %c4 = arith.constant 4 : index
    %c0_40 = arith.constant 0 : index
    %c0_41 = arith.constant 0 : index
    %49 = vector.load %arg6[%c4, %c0_40, %c0_41] : memref<7x128x128xf32, #tpu.memory_space<vmem>>, vector<1x128x128xf32>
    %50 = vector.shape_cast %49 : vector<1x128x128xf32> to vector<128x128xf32>
    %cst_42 = arith.constant dense<0.000000e+00> : vector<16x128xf32>
    %51 = tpu.matmul %48, %50, %cst_42 {dimension_numbers = #tpu.dot_dimension_numbers<[1], [0], [0], [1], [0, 0, 1, 1], [], []>} : vector<16x128xf32>, vector<128x128xf32>, vector<16x128xf32> -> vector<16x128xf32>
    %c4_43 = arith.constant 4 : index
    %c0_44 = arith.constant 0 : index
    %c0_45 = arith.constant 0 : index
    %52 = vector.load %arg7[%c4_43, %c0_44, %c0_45] : memref<7x1x128xf32, #tpu.memory_space<vmem>>, vector<1x1x128xf32>
    %53 = vector.shape_cast %52 : vector<1x1x128xf32> to vector<1x128xf32>
    %54 = vector.broadcast %53 : vector<1x128xf32> to vector<16x128xf32>
    %55 = arith.addf %51, %54 : vector<16x128xf32>
    %cst_46 = arith.constant 0.000000e+00 : f32
    %56 = vector.broadcast %cst_46 : f32 to vector<16x128xf32>
    %57 = arith.maximumf %55, %56 : vector<16x128xf32>
    %c5 = arith.constant 5 : index
    %c0_47 = arith.constant 0 : index
    %c0_48 = arith.constant 0 : index
    %58 = vector.load %arg6[%c5, %c0_47, %c0_48] : memref<7x128x128xf32, #tpu.memory_space<vmem>>, vector<1x128x128xf32>
    %59 = vector.shape_cast %58 : vector<1x128x128xf32> to vector<128x128xf32>
    %cst_49 = arith.constant dense<0.000000e+00> : vector<16x128xf32>
    %60 = tpu.matmul %57, %59, %cst_49 {dimension_numbers = #tpu.dot_dimension_numbers<[1], [0], [0], [1], [0, 0, 1, 1], [], []>} : vector<16x128xf32>, vector<128x128xf32>, vector<16x128xf32> -> vector<16x128xf32>
    %c5_50 = arith.constant 5 : index
    %c0_51 = arith.constant 0 : index
    %c0_52 = arith.constant 0 : index
    %61 = vector.load %arg7[%c5_50, %c0_51, %c0_52] : memref<7x1x128xf32, #tpu.memory_space<vmem>>, vector<1x1x128xf32>
    %62 = vector.shape_cast %61 : vector<1x1x128xf32> to vector<1x128xf32>
    %63 = vector.broadcast %62 : vector<1x128xf32> to vector<16x128xf32>
    %64 = arith.addf %60, %63 : vector<16x128xf32>
    %cst_53 = arith.constant 0.000000e+00 : f32
    %65 = vector.broadcast %cst_53 : f32 to vector<16x128xf32>
    %66 = arith.maximumf %64, %65 : vector<16x128xf32>
    %c6 = arith.constant 6 : index
    %c0_54 = arith.constant 0 : index
    %c0_55 = arith.constant 0 : index
    %67 = vector.load %arg6[%c6, %c0_54, %c0_55] : memref<7x128x128xf32, #tpu.memory_space<vmem>>, vector<1x128x128xf32>
    %68 = vector.shape_cast %67 : vector<1x128x128xf32> to vector<128x128xf32>
    %cst_56 = arith.constant dense<0.000000e+00> : vector<16x128xf32>
    %69 = tpu.matmul %66, %68, %cst_56 {dimension_numbers = #tpu.dot_dimension_numbers<[1], [0], [0], [1], [0, 0, 1, 1], [], []>} : vector<16x128xf32>, vector<128x128xf32>, vector<16x128xf32> -> vector<16x128xf32>
    %c6_57 = arith.constant 6 : index
    %c0_58 = arith.constant 0 : index
    %c0_59 = arith.constant 0 : index
    %70 = vector.load %arg7[%c6_57, %c0_58, %c0_59] : memref<7x1x128xf32, #tpu.memory_space<vmem>>, vector<1x1x128xf32>
    %71 = vector.shape_cast %70 : vector<1x1x128xf32> to vector<1x128xf32>
    %72 = vector.broadcast %71 : vector<1x128xf32> to vector<16x128xf32>
    %73 = arith.addf %69, %72 : vector<16x128xf32>
    %cst_60 = arith.constant 0.000000e+00 : f32
    %74 = vector.broadcast %cst_60 : f32 to vector<16x128xf32>
    %75 = arith.maximumf %73, %74 : vector<16x128xf32>
    %c0_61 = arith.constant 0 : index
    %c0_62 = arith.constant 0 : index
    %76 = vector.load %arg8[%c0_61, %c0_62] : memref<128x64xf32, #tpu.memory_space<vmem>>, vector<128x64xf32>
    %cst_63 = arith.constant dense<0.000000e+00> : vector<16x64xf32>
    %77 = tpu.matmul %75, %76, %cst_63 {dimension_numbers = #tpu.dot_dimension_numbers<[1], [0], [0], [1], [0, 0, 1, 1], [], []>} : vector<16x128xf32>, vector<128x64xf32>, vector<16x64xf32> -> vector<16x64xf32>
    %78 = arith.addf %77, %12 : vector<16x64xf32>
    %cst_64 = arith.constant 0.000000e+00 : f32
    %79 = vector.broadcast %cst_64 : f32 to vector<16x64xf32>
    %80 = arith.maximumf %78, %79 : vector<16x64xf32>
    %c0_65 = arith.constant 0 : index
    %c0_66 = arith.constant 0 : index
    %81 = vector.load %arg9[%c0_65, %c0_66] : memref<64x64xf32, #tpu.memory_space<vmem>>, vector<64x64xf32>
    %cst_67 = arith.constant dense<0.000000e+00> : vector<16x64xf32>
    %82 = tpu.matmul %80, %81, %cst_67 {dimension_numbers = #tpu.dot_dimension_numbers<[1], [0], [0], [1], [0, 0, 1, 1], [], []>} : vector<16x64xf32>, vector<64x64xf32>, vector<16x64xf32> -> vector<16x64xf32>
    %c0_68 = arith.constant 0 : index
    %c0_69 = arith.constant 0 : index
    %83 = vector.load %arg10[%c0_68, %c0_69] : memref<1x64xf32, #tpu.memory_space<vmem>>, vector<1x64xf32>
    %84 = vector.broadcast %83 : vector<1x64xf32> to vector<16x64xf32>
    %85 = arith.addf %82, %84 : vector<16x64xf32>
    %cst_70 = arith.constant 0.000000e+00 : f32
    %86 = vector.broadcast %cst_70 : f32 to vector<16x64xf32>
    %87 = arith.maximumf %85, %86 : vector<16x64xf32>
    %c0_71 = arith.constant 0 : index
    %c0_72 = arith.constant 0 : index
    %88 = vector.load %arg11[%c0_71, %c0_72] : memref<128x28xf32, #tpu.memory_space<vmem>>, vector<128x28xf32>
    %cst_73 = arith.constant dense<0.000000e+00> : vector<16x28xf32>
    %89 = tpu.matmul %75, %88, %cst_73 {dimension_numbers = #tpu.dot_dimension_numbers<[1], [0], [0], [1], [0, 0, 1, 1], [], []>} : vector<16x128xf32>, vector<128x28xf32>, vector<16x28xf32> -> vector<16x28xf32>
    %c0_74 = arith.constant 0 : index
    %c0_75 = arith.constant 0 : index
    %90 = vector.load %arg12[%c0_74, %c0_75] : memref<1x28xf32, #tpu.memory_space<vmem>>, vector<1x28xf32>
    %91 = vector.broadcast %90 : vector<1x28xf32> to vector<16x28xf32>
    %92 = arith.addf %89, %91 : vector<16x28xf32>
    %c0_76 = arith.constant 0 : index
    %c0_77 = arith.constant 0 : index
    %93 = vector.load %arg13[%c0_76, %c0_77] : memref<64x28xf32, #tpu.memory_space<vmem>>, vector<64x28xf32>
    %cst_78 = arith.constant dense<0.000000e+00> : vector<16x28xf32>
    %94 = tpu.matmul %87, %93, %cst_78 {dimension_numbers = #tpu.dot_dimension_numbers<[1], [0], [0], [1], [0, 0, 1, 1], [], []>} : vector<16x64xf32>, vector<64x28xf32>, vector<16x28xf32> -> vector<16x28xf32>
    %95 = arith.addf %92, %94 : vector<16x28xf32>
    %c0_79 = arith.constant 0 : index
    %c0_80 = arith.constant 0 : index
    %96 = vector.load %arg14[%c0_79, %c0_80] : memref<1x28xf32, #tpu.memory_space<vmem>>, vector<1x28xf32>
    %97 = vector.broadcast %96 : vector<1x28xf32> to vector<16x28xf32>
    %98 = arith.addf %95, %97 : vector<16x28xf32>
    %c0_81 = arith.constant 0 : index
    %c0_82 = arith.constant 0 : index
    %99 = vector.load %arg15[%c0_81, %c0_82] : memref<16x28xf32, #tpu.memory_space<vmem>>, vector<16x28xf32>
    tpu.vector_store %arg15[%c0_81, %c0_82], %98 {strides = array<i32>} : memref<16x28xf32, #tpu.memory_space<vmem>>, vector<16x28xf32>,
    return
  }
  func.func @transform_0(%arg0: i32) -> (i32, i32) {
    %c0_i32 = arith.constant 0 : i32
    %c0_i32_0 = arith.constant 0 : i32
    return %arg0, %c0_i32 : i32, i32
  }
  func.func @transform_1(%arg0: i32) -> (i32, i32) {
    %c0_i32 = arith.constant 0 : i32
    %c0_i32_0 = arith.constant 0 : i32
    %c0_i32_1 = arith.constant 0 : i32
    return %c0_i32, %c0_i32_0 : i32, i32
  }
  func.func @transform_2(%arg0: i32) -> (i32, i32) {
    %c0_i32 = arith.constant 0 : i32
    %c0_i32_0 = arith.constant 0 : i32
    %c0_i32_1 = arith.constant 0 : i32
    return %c0_i32, %c0_i32_0 : i32, i32
  }
  func.func @transform_3(%arg0: i32) -> (i32, i32) {
    %c0_i32 = arith.constant 0 : i32
    %c0_i32_0 = arith.constant 0 : i32
    %c0_i32_1 = arith.constant 0 : i32
    return %c0_i32, %c0_i32_0 : i32, i32
  }
  func.func @transform_4(%arg0: i32) -> (i32, i32) {
    %c0_i32 = arith.constant 0 : i32
    %c0_i32_0 = arith.constant 0 : i32
    %c0_i32_1 = arith.constant 0 : i32
    return %c0_i32, %c0_i32_0 : i32, i32
  }
  func.func @transform_5(%arg0: i32) -> (i32, i32, i32) {
    %c0_i32 = arith.constant 0 : i32
    %c0_i32_0 = arith.constant 0 : i32
    %c0_i32_1 = arith.constant 0 : i32
    %c0_i32_2 = arith.constant 0 : i32
    return %c0_i32, %c0_i32_0, %c0_i32_1 : i32, i32, i32
  }
  func.func @transform_6(%arg0: i32) -> (i32, i32, i32) {
    %c0_i32 = arith.constant 0 : i32
    %c0_i32_0 = arith.constant 0 : i32
    %c0_i32_1 = arith.constant 0 : i32
    %c0_i32_2 = arith.constant 0 : i32
    return %c0_i32, %c0_i32_0, %c0_i32_1 : i32, i32, i32
  }
  func.func @transform_7(%arg0: i32) -> (i32, i32) {
    %c0_i32 = arith.constant 0 : i32
    %c0_i32_0 = arith.constant 0 : i32
    %c0_i32_1 = arith.constant 0 : i32
    return %c0_i32, %c0_i32_0 : i32, i32
  }
  func.func @transform_8(%arg0: i32) -> (i32, i32) {
    %c0_i32 = arith.constant 0 : i32
    %c0_i32_0 = arith.constant 0 : i32
    %c0_i32_1 = arith.constant 0 : i32
    return %c0_i32, %c0_i32_0 : i32, i32
  }
  func.func @transform_9(%arg0: i32) -> (i32, i32) {
    %c0_i32 = arith.constant 0 : i32
    %c0_i32_0 = arith.constant 0 : i32
    %c0_i32_1 = arith.constant 0 : i32
    return %c0_i32, %c0_i32_0 : i32, i32
  }
  func.func @transform_10(%arg0: i32) -> (i32, i32) {
    %c0_i32 = arith.constant 0 : i32
    %c0_i32_0 = arith.constant 0 : i32
    %c0_i32_1 = arith.constant 0 : i32
    return %c0_i32, %c0_i32_0 : i32, i32
  }
  func.func @transform_11(%arg0: i32) -> (i32, i32) {
    %c0_i32 = arith.constant 0 : i32
    %c0_i32_0 = arith.constant 0 : i32
    %c0_i32_1 = arith.constant 0 : i32
    return %c0_i32, %c0_i32_0 : i32, i32
  }
  func.func @transform_12(%arg0: i32) -> (i32, i32) {
    %c0_i32 = arith.constant 0 : i32
    %c0_i32_0 = arith.constant 0 : i32
    %c0_i32_1 = arith.constant 0 : i32
    return %c0_i32, %c0_i32_0 : i32, i32
  }
  func.func @transform_13(%arg0: i32) -> (i32, i32) {
    %c0_i32 = arith.constant 0 : i32
    %c0_i32_0 = arith.constant 0 : i32
    %c0_i32_1 = arith.constant 0 : i32
    return %c0_i32, %c0_i32_0 : i32, i32
  }
  func.func @transform_14(%arg0: i32) -> (i32, i32) {
    %c0_i32 = arith.constant 0 : i32
    %c0_i32_0 = arith.constant 0 : i32
    return %arg0, %c0_i32 : i32, i32
  }
}

</mosaic_0001>

<llo_original>
// kernel: tpu_custom_call.1
$region0: #{tpu_custom_call.1}
  #allocation0 [shape = 'u32[]', space=smem, size = 0x4, offset = 0x4, fixed_abs, tag = 'smem constant byte address 0x4 - core index']
  #allocation1 [shape = 'u32[144,128]{1,0:T(1,128)}', space=vmem, size = 0x12000, scoped, tag = 'internal scratch']
  %s0 = inlined_call_operand.vmem [shape: f32[16,24], index: 0, kind: input, shape index: {}]
  %s1 = inlined_call_operand.vmem [shape: f32[24,128], index: 1, kind: input, shape index: {}]
  %s2 = inlined_call_operand.vmem [shape: f32[1,128], index: 2, kind: input, shape index: {}]
  %s3 = inlined_call_operand.vmem [shape: f32[24,64], index: 3, kind: input, shape index: {}]
  %s4 = inlined_call_operand.vmem [shape: f32[1,64], index: 4, kind: input, shape index: {}]
  %s5 = inlined_call_operand.hbm [shape: f32[7,128,128], index: 5, kind: input, shape index: {}]
  %s6 = inlined_call_operand.vmem [shape: f32[7,1,128], index: 6, kind: input, shape index: {}]
  %s7 = inlined_call_operand.vmem [shape: f32[128,64], index: 7, kind: input, shape index: {}]
  %s8 = inlined_call_operand.vmem [shape: f32[64,64], index: 8, kind: input, shape index: {}]
  %s9 = inlined_call_operand.vmem [shape: f32[1,64], index: 9, kind: input, shape index: {}]
  %s10 = inlined_call_operand.vmem [shape: f32[128,28], index: 10, kind: input, shape index: {}]
  %s11 = inlined_call_operand.vmem [shape: f32[1,28], index: 11, kind: input, shape index: {}]
  %s12 = inlined_call_operand.vmem [shape: f32[64,28], index: 12, kind: input, shape index: {}]
  %s13 = inlined_call_operand.vmem [shape: f32[1,28], index: 13, kind: input, shape index: {}]
  %s14 = inlined_call_operand.hbm [shape: f32[16,28], index: 14, kind: output, shape index: {}]
  %s15 = sld [smem:[#allocation0]]
  $region70: #{tpu_custom_call.1} parent=0
    _
  %s17 = ssub.s32 1, %s15
  %s18 = scalar_select 0, %s17, %s15
  $region1: #{tpu_custom_call.1} parent=0
    #allocation2 [shape = 'u8[458752]{0}', space=vmem, size = 0x70000, scoped, tag = 'input window, operand 5, single buffered']
    #allocation3 [shape = 's32[1]{0}', space=sflag, size = 0x4, scoped, tag = 'scoped memory for tpu_custom_call.1']
    #allocation4 [shape = 's32[1]{0}', space=sflag, size = 0x4, scoped, tag = 'scoped memory for tpu_custom_call.1']
    #allocation5 [shape = 'u8[8192]{0}', space=vmem, size = 0x2000, scoped, tag = 'output window, operand 0, single buffered']
    %19 = vsyncpa [#allocation3], 0
    %20 = vsyncpa [#allocation4], 0
    // Predicated region
    $region2: #{tpu_custom_call.1} parent=1 // pred_check
      _
    $region3: #{tpu_custom_call.1} parent=1 // pred_check_branch
      %22 = sbr.rel (0) target = $region5
    $region4: #{tpu_custom_call.1} parent=1 // pred_region
      _
    $region5: #{tpu_custom_call.1} parent=1 // pred_fallthru
      _
    // Predicated region
    $region6: #{tpu_custom_call.1} parent=1 // pred_check
      _
    $region7: #{tpu_custom_call.1} parent=1 // pred_check_branch
      %24 = sbr.rel (0) target = $region9
    $region8: #{tpu_custom_call.1} parent=1 // pred_region
      _
    $region9: #{tpu_custom_call.1} parent=1 // pred_fallthru
      _
    // Predicated region
    $region10: #{tpu_custom_call.1} parent=1 // pred_check
      _
    $region11: #{tpu_custom_call.1} parent=1 // pred_check_branch
      %26 = sbr.rel (0) target = $region13
    $region12: #{tpu_custom_call.1} parent=1 // pred_region
      _
    $region13: #{tpu_custom_call.1} parent=1 // pred_fallthru
      _
    // Predicated region
    $region14: #{tpu_custom_call.1} parent=1 // pred_check
      _
    $region15: #{tpu_custom_call.1} parent=1 // pred_check_branch
      %28 = sbr.rel (0) target = $region17
    $region16: #{tpu_custom_call.1} parent=1 // pred_region
      _
    $region17: #{tpu_custom_call.1} parent=1 // pred_fallthru
      _
    // Predicated region
    $region18: #{tpu_custom_call.1} parent=1 // pred_check
      _
    $region19: #{tpu_custom_call.1} parent=1 // pred_check_branch
      %30 = sbr.rel (0) target = $region21
    $region20: #{tpu_custom_call.1} parent=1 // pred_region
      _
    $region21: #{tpu_custom_call.1} parent=1 // pred_fallthru
      _
    // Predicated region
    $region22: #{tpu_custom_call.1} parent=1 // pred_check
      _
    $region23: #{tpu_custom_call.1} parent=1 // pred_check_branch
      %32 = sbr.rel (0) target = $region25
    $region24: #{tpu_custom_call.1} parent=1 // pred_region
      %s34 = ssub.s32 14336, 14336
      %35 = vsyncadd [#allocation3], %s34
      %s36 = sshll.u32 [#allocation2], 4
      %s37 = int_to_ptr.vmem [resolvable:$true] %s36
      %42 = dma.hbm_to_vmem [thread:$0]  %s5, 14336, %s37, [#allocation3], 128, 128, 8
    $region25: #{tpu_custom_call.1} parent=1 // pred_fallthru
      _
    // Predicated region
    $region26: #{tpu_custom_call.1} parent=1 // pred_check
      _
    $region27: #{tpu_custom_call.1} parent=1 // pred_check_branch
      %44 = sbr.rel (0) target = $region29
    $region28: #{tpu_custom_call.1} parent=1 // pred_region
      _
    $region29: #{tpu_custom_call.1} parent=1 // pred_fallthru
      _
    // Predicated region
    $region30: #{tpu_custom_call.1} parent=1 // pred_check
      _
    $region31: #{tpu_custom_call.1} parent=1 // pred_check_branch
      %46 = sbr.rel (0) target = $region33
    $region32: #{tpu_custom_call.1} parent=1 // pred_region
      _
    $region33: #{tpu_custom_call.1} parent=1 // pred_fallthru
      _
    // Predicated region
    $region34: #{tpu_custom_call.1} parent=1 // pred_check
      _
    $region35: #{tpu_custom_call.1} parent=1 // pred_check_branch
      %48 = sbr.rel (0) target = $region37
    $region36: #{tpu_custom_call.1} parent=1 // pred_region
      _
    $region37: #{tpu_custom_call.1} parent=1 // pred_fallthru
      _
    // Predicated region
    $region38: #{tpu_custom_call.1} parent=1 // pred_check
      _
    $region39: #{tpu_custom_call.1} parent=1 // pred_check_branch
      %50 = sbr.rel (0) target = $region41
    $region40: #{tpu_custom_call.1} parent=1 // pred_region
      _
    $region41: #{tpu_custom_call.1} parent=1 // pred_fallthru
      _
    // Predicated region
    $region42: #{tpu_custom_call.1} parent=1 // pred_check
      _
    $region43: #{tpu_custom_call.1} parent=1 // pred_check_branch
      %52 = sbr.rel (0) target = $region45
    $region44: #{tpu_custom_call.1} parent=1 // pred_region
      _
    $region45: #{tpu_custom_call.1} parent=1 // pred_fallthru
      _
    // Predicated region
    $region46: #{tpu_custom_call.1} parent=1 // pred_check
      _
    $region47: #{tpu_custom_call.1} parent=1 // pred_check_branch
      %54 = sbr.rel (0) target = $region49
    $region48: #{tpu_custom_call.1} parent=1 // pred_region
      _
    $region49: #{tpu_custom_call.1} parent=1 // pred_fallthru
      _
    // Predicated region
    $region50: #{tpu_custom_call.1} parent=1 // pred_check
      _
    $region51: #{tpu_custom_call.1} parent=1 // pred_check_branch
      %56 = sbr.rel (0) target = $region53
    $region52: #{tpu_custom_call.1} parent=1 // pred_region
      _
    $region53: #{tpu_custom_call.1} parent=1 // pred_fallthru
      _
    // Predicated region
    $region54: #{tpu_custom_call.1} parent=1 // pred_check
      _
    $region55: #{tpu_custom_call.1} parent=1 // pred_check_branch
      %58 = sbr.rel (0) target = $region57
    $region56: #{tpu_custom_call.1} parent=1 // pred_region
      _
    $region57: #{tpu_custom_call.1} parent=1 // pred_fallthru
      _
    // Predicated region
    $region58: #{tpu_custom_call.1} parent=1 // pred_check
      _
    $region59: #{tpu_custom_call.1} parent=1 // pred_check_branch
      %60 = sbr.rel (0) target = $region61
    $region60: #{tpu_custom_call.1} parent=1 // pred_region
      %61 = dma.done [#allocation3], 14336
    $region61: #{tpu_custom_call.1} parent=1 // pred_fallthru
      _
    %v62 = vld [vmem:[%s0] sm:$0xff]
    %v63 = vld [vmem:[%s0 + $0x8] sm:$0xff]
    %v64 = vld [vmem:[%s1] sm:$0xff]
    %v65 = vld [vmem:[%s1 + $0x8] sm:$0xff]
    %v66 = vld [vmem:[%s1 + $0x10] sm:$0xff]
    %v67 = vld [vmem:[%s2] sm:$0x1]
    %v69 = vlaneseq
    %v70 = vshrl.u32 %v69, 7
    %v71 = vsub.s32 0, %v70
    %v72 = vrot.slane %v67, %v71
    %vm74 = vcmask 195584
    %v76 = vsel %vm74, %v62, 0
    %v79 = vsel %vm74, %v63, 0
    %81 = vmatprep.subr.mxu0 0.0
    %82 = vmatpush1.msra.mxu0 %v64
    %83 = vmatprep.subr.mxu0 0.0
    %84 = vmatpush1.msra.mxu0 %v65
    %85 = vmatprep.subr.mxu0 0.0
    %86 = vmatpush1.msra.mxu0 %v66
    %87 = vmatprep.subr.mxu0 0.0
    %88 = vmatpush1.msra.mxu0 0.0
    %89 = vmatprep.subr.mxu0 0.0
    %90 = vmatpush1.msra.mxu0 0.0
    %91 = vmatprep.subr.mxu0 0.0
    %92 = vmatpush1.msra.mxu0 0.0
    %93 = vmatprep.subr.mxu0 0.0
    %94 = vmatpush1.msra.mxu0 0.0
    %95 = vmatprep.subr.mxu0 0.0
    %96 = vmatpush1.msra.mxu0 0.0
    %97 = vmatprep.subr.mxu0 0.0
    %98 = vmatpush1.msra.mxu0 0.0
    %99 = vmatprep.subr.mxu0 0.0
    %100 = vmatpush1.msra.mxu0 0.0
    %101 = vmatprep.subr.mxu0 0.0
    %102 = vmatpush1.msra.mxu0 0.0
    %103 = vmatprep.subr.mxu0 0.0
    %104 = vmatpush1.msra.mxu0 0.0
    %105 = vmatprep.subr.mxu0 0.0
    %106 = vmatpush1.msra.mxu0 0.0
    %107 = vmatprep.subr.mxu0 0.0
    %108 = vmatpush1.msra.mxu0 0.0
    %109 = vmatprep.subr.mxu0 0.0
    %110 = vmatpush1.msra.mxu0 0.0
    %111 = vmatprep.subr.mxu0 0.0
    %112 = vmatpush1.msra.mxu0 0.0
    %113 = vmatprep.subr.mxu0 0.0
    %114 = vmatpush1.msra.mxu0 0.0
    %115 = vmatprep.subr.mxu0 0.0
    %116 = vmatpush1.msra.mxu0 0.0
    %117 = vmatprep.subr.mxu0 0.0
    %118 = vmatpush1.msra.mxu0 0.0
    %119 = vmatprep.subr.mxu0 0.0
    %120 = vmatpush1.msra.mxu0 0.0
    %121 = vmatprep.subr.mxu0 0.0
    %122 = vmatpush1.msra.mxu0 0.0
    %123 = vmatprep.subr.mxu0 0.0
    %124 = vmatpush1.msra.mxu0 0.0
    %125 = vmatprep.subr.mxu0 0.0
    %126 = vmatpush1.msra.mxu0 0.0
    %127 = vmatprep.subr.mxu0 0.0
    %128 = vmatpush1.msra.mxu0 0.0
    %129 = vmatprep.subr.mxu0 0.0
    %130 = vmatpush1.msra.mxu0 0.0
    %131 = vmatprep.subr.mxu0 0.0
    %132 = vmatpush1.msra.mxu0 0.0
    %133 = vmatprep.subr.mxu0 0.0
    %134 = vmatpush1.msra.mxu0 0.0
    %135 = vmatprep.subr.mxu0 0.0
    %136 = vmatpush1.msra.mxu0 0.0
    %137 = vmatprep.subr.mxu0 0.0
    %138 = vmatpush1.msra.mxu0 0.0
    %139 = vmatprep.subr.mxu0 0.0
    %140 = vmatpush1.msra.mxu0 0.0
    %141 = vmatprep.subr.mxu0 0.0
    %142 = vmatpush1.msra.mxu0 0.0
    %143 = vmatprep.subr.mxu0 0.0
    %144 = vmatpush1.msra.mxu0 0.0
    %145 = vmatprep.mubr.f32.mxu0 0.0
    %146 = vmatmul.mubr.f32.gmra.mrb[0].mxu0 %v76
    %v147 = vpop.f32.mrb[0].mxu0
    %v148 = vadd.f32 %v72, %v147
    %v149 = vpop.f32.mrb[0].mxu0
    %150 = vmatprep.mubr.f32.mxu0 0.0
    %151 = vmatmul.mubr.f32.gmra.mrb[0].mxu0 %v79
    %v152 = vpop.f32.mrb[0].mxu0
    %v153 = vadd.f32 %v72, %v152
    %v154 = vpop.f32.mrb[0].mxu0
    %155 = vdwg.mxu0
    %v156 = vmax.f32 %v148, 0.0
    %v157 = vmax.f32 %v153, 0.0
    %v158 = vld [vmem:[%s3] sm:$0xff]
    %v159 = vld [vmem:[%s3 + $0x8] sm:$0xff]
    %v160 = vld [vmem:[%s3 + $0x10] sm:$0xff]
    %v161 = vld [vmem:[%s4] sm:$0x1]
    %v163 = vlaneseq
    %v164 = vshrl.u32 %v163, 7
    %v165 = vsub.s32 0, %v164
    %v166 = vrot.slane %v161, %v165
    %168 = vmatprep.subr.mxu0 0.0
    %169 = vmatpush1.msra.mxu0 %v158
    %170 = vmatprep.subr.mxu0 0.0
    %171 = vmatpush1.msra.mxu0 %v159
    %172 = vmatprep.subr.mxu0 0.0
    %173 = vmatpush1.msra.mxu0 %v160
    %174 = vmatprep.subr.mxu0 0.0
    %175 = vmatpush1.msra.mxu0 0.0
    %176 = vmatprep.subr.mxu0 0.0
    %177 = vmatpush1.msra.mxu0 0.0
    %178 = vmatprep.subr.mxu0 0.0
    %179 = vmatpush1.msra.mxu0 0.0
    %180 = vmatprep.subr.mxu0 0.0
    %181 = vmatpush1.msra.mxu0 0.0
    %182 = vmatprep.subr.mxu0 0.0
    %183 = vmatpush1.msra.mxu0 0.0
    %184 = vmatprep.subr.mxu0 0.0
    %185 = vmatpush1.msra.mxu0 0.0
    %186 = vmatprep.subr.mxu0 0.0
    %187 = vmatpush1.msra.mxu0 0.0
    %188 = vmatprep.subr.mxu0 0.0
    %189 = vmatpush1.msra.mxu0 0.0
    %190 = vmatprep.subr.mxu0 0.0
    %191 = vmatpush1.msra.mxu0 0.0
    %192 = vmatprep.subr.mxu0 0.0
    %193 = vmatpush1.msra.mxu0 0.0
    %194 = vmatprep.subr.mxu0 0.0
    %195 = vmatpush1.msra.mxu0 0.0
    %196 = vmatprep.subr.mxu0 0.0
    %197 = vmatpush1.msra.mxu0 0.0
    %198 = vmatprep.subr.mxu0 0.0
    %199 = vmatpush1.msra.mxu0 0.0
    %200 = vmatprep.subr.mxu0 0.0
    %201 = vmatpush1.msra.mxu0 0.0
    %202 = vmatprep.subr.mxu0 0.0
    %203 = vmatpush1.msra.mxu0 0.0
    %204 = vmatprep.subr.mxu0 0.0
    %205 = vmatpush1.msra.mxu0 0.0
    %206 = vmatprep.subr.mxu0 0.0
    %207 = vmatpush1.msra.mxu0 0.0
    %208 = vmatprep.subr.mxu0 0.0
    %209 = vmatpush1.msra.mxu0 0.0
    %210 = vmatprep.subr.mxu0 0.0
    %211 = vmatpush1.msra.mxu0 0.0
    %212 = vmatprep.subr.mxu0 0.0
    %213 = vmatpush1.msra.mxu0 0.0
    %214 = vmatprep.subr.mxu0 0.0
    %215 = vmatpush1.msra.mxu0 0.0
    %216 = vmatprep.subr.mxu0 0.0
    %217 = vmatpush1.msra.mxu0 0.0
    %218 = vmatprep.subr.mxu0 0.0
    %219 = vmatpush1.msra.mxu0 0.0
    %220 = vmatprep.subr.mxu0 0.0
    %221 = vmatpush1.msra.mxu0 0.0
    %222 = vmatprep.subr.mxu0 0.0
    %223 = vmatpush1.msra.mxu0 0.0
    %224 = vmatprep.subr.mxu0 0.0
    %225 = vmatpush1.msra.mxu0 0.0
    %226 = vmatprep.subr.mxu0 0.0
    %227 = vmatpush1.msra.mxu0 0.0
    %228 = vmatprep.subr.mxu0 0.0
    %229 = vmatpush1.msra.mxu0 0.0
    %230 = vmatprep.subr.mxu0 0.0
    %231 = vmatpush1.msra.mxu0 0.0
    %232 = vmatprep.mubr.f32.mxu0 0.0
    %233 = vmatmul.mubr.f32.gmra.mrb[0].mxu0 %v76
    %v234 = vpop.f32.mrb[0].mxu0
    %v235 = vadd.f32 %v166, %v234
    %v236 = vpop.f32.mrb[0].mxu0
    %237 = vmatprep.mubr.f32.mxu0 0.0
    %238 = vmatmul.mubr.f32.gmra.mrb[0].mxu0 %v79
    %v239 = vpop.f32.mrb[0].mxu0
    %v240 = vadd.f32 %v166, %v239
    %v241 = vpop.f32.mrb[0].mxu0
    %242 = vdwg.mxu0
    %v243 = vld [vmem:[#allocation2] sm:$0xff]
    %v244 = vld [vmem:[#allocation2 + $0x8] sm:$0xff]
    %v245 = vld [vmem:[#allocation2 + $0x10] sm:$0xff]
    %v246 = vld [vmem:[#allocation2 + $0x18] sm:$0xff]
    %v247 = vld [vmem:[#allocation2 + $0x20] sm:$0xff]
    %v248 = vld [vmem:[#allocation2 + $0x28] sm:$0xff]
    %v249 = vld [vmem:[#allocation2 + $0x30] sm:$0xff]
    %v250 = vld [vmem:[#allocation2 + $0x38] sm:$0xff]
    %v251 = vld [vmem:[#allocation2 + $0x40] sm:$0xff]
    %v252 = vld [vmem:[#allocation2 + $0x48] sm:$0xff]
    %v253 = vld [vmem:[#allocation2 + $0x50] sm:$0xff]
    %v254 = vld [vmem:[#allocation2 + $0x58] sm:$0xff]
    %v255 = vld [vmem:[#allocation2 + $0x60] sm:$0xff]
    %v256 = vld [vmem:[#allocation2 + $0x68] sm:$0xff]
    %v257 = vld [vmem:[#allocation2 + $0x70] sm:$0xff]
    %v258 = vld [vmem:[#allocation2 + $0x78] sm:$0xff]
    %v259 = vld [vmem:[%s6] sm:$0x1]
    %v261 = vlaneseq
    %v262 = vshrl.u32 %v261, 7
    %v263 = vsub.s32 0, %v262
    %v264 = vrot.slane %v259, %v263
    %266 = vmatprep.subr.mxu0 0.0
    %267 = vmatpush1.msra.mxu0 %v243
    %268 = vmatprep.subr.mxu0 0.0
    %269 = vmatpush1.msra.mxu0 %v244
    %270 = vmatprep.subr.mxu0 0.0
    %271 = vmatpush1.msra.mxu0 %v245
    %272 = vmatprep.subr.mxu0 0.0
    %273 = vmatpush1.msra.mxu0 %v246
    %274 = vmatprep.subr.mxu0 0.0
    %275 = vmatpush1.msra.mxu0 %v247
    %276 = vmatprep.subr.mxu0 0.0
    %277 = vmatpush1.msra.mxu0 %v248
    %278 = vmatprep.subr.mxu0 0.0
    %279 = vmatpush1.msra.mxu0 %v249
    %280 = vmatprep.subr.mxu0 0.0
    %281 = vmatpush1.msra.mxu0 %v250
    %282 = vmatprep.subr.mxu0 0.0
    %283 = vmatpush1.msra.mxu0 %v251
    %284 = vmatprep.subr.mxu0 0.0
    %285 = vmatpush1.msra.mxu0 %v252
    %286 = vmatprep.subr.mxu0 0.0
    %287 = vmatpush1.msra.mxu0 %v253
    %288 = vmatprep.subr.mxu0 0.0
    %289 = vmatpush1.msra.mxu0 %v254
    %290 = vmatprep.subr.mxu0 0.0
    %291 = vmatpush1.msra.mxu0 %v255
    %292 = vmatprep.subr.mxu0 0.0
    %293 = vmatpush1.msra.mxu0 %v256
    %294 = vmatprep.subr.mxu0 0.0
    %295 = vmatpush1.msra.mxu0 %v257
    %296 = vmatprep.subr.mxu0 0.0
    %297 = vmatpush1.msra.mxu0 %v258
    %298 = vmatprep.subr.mxu0 0.0
    %299 = vmatpush1.msra.mxu0 0.0
    %300 = vmatprep.subr.mxu0 0.0
    %301 = vmatpush1.msra.mxu0 0.0
    %302 = vmatprep.subr.mxu0 0.0
    %303 = vmatpush1.msra.mxu0 0.0
    %304 = vmatprep.subr.mxu0 0.0
    %305 = vmatpush1.msra.mxu0 0.0
    %306 = vmatprep.subr.mxu0 0.0
    %307 = vmatpush1.msra.mxu0 0.0
    %308 = vmatprep.subr.mxu0 0.0
    %309 = vmatpush1.msra.mxu0 0.0
    %310 = vmatprep.subr.mxu0 0.0
    %311 = vmatpush1.msra.mxu0 0.0
    %312 = vmatprep.subr.mxu0 0.0
    %313 = vmatpush1.msra.mxu0 0.0
    %314 = vmatprep.subr.mxu0 0.0
    %315 = vmatpush1.msra.mxu0 0.0
    %316 = vmatprep.subr.mxu0 0.0
    %317 = vmatpush1.msra.mxu0 0.0
    %318 = vmatprep.subr.mxu0 0.0
    %319 = vmatpush1.msra.mxu0 0.0
    %320 = vmatprep.subr.mxu0 0.0
    %321 = vmatpush1.msra.mxu0 0.0
    %322 = vmatprep.subr.mxu0 0.0
    %323 = vmatpush1.msra.mxu0 0.0
    %324 = vmatprep.subr.mxu0 0.0
    %325 = vmatpush1.msra.mxu0 0.0
    %326 = vmatprep.subr.mxu0 0.0
    %327 = vmatpush1.msra.mxu0 0.0
    %328 = vmatprep.subr.mxu0 0.0
    %329 = vmatpush1.msra.mxu0 0.0
    %330 = vmatprep.mubr.f32.mxu0 0.0
    %331 = vmatmul.mubr.f32.gmra.mrb[0].mxu0 %v156
    %v332 = vpop.f32.mrb[0].mxu0
    %v333 = vadd.f32 %v264, %v332
    %v334 = vpop.f32.mrb[0].mxu0
    %335 = vmatprep.mubr.f32.mxu0 0.0
    %336 = vmatmul.mubr.f32.gmra.mrb[0].mxu0 %v157
    %v337 = vpop.f32.mrb[0].mxu0
    %v338 = vadd.f32 %v264, %v337
    %v339 = vpop.f32.mrb[0].mxu0
    %340 = vdwg.mxu0
    %v341 = vmax.f32 %v333, 0.0
    %v342 = vmax.f32 %v338, 0.0
    %s343 = scalar_lea.vmem [#allocation2], 128
    %v344 = vld [vmem:[%s343] sm:$0xff]
    %v345 = vld [vmem:[%s343 + $0x8] sm:$0xff]
    %v346 = vld [vmem:[%s343 + $0x10] sm:$0xff]
    %v347 = vld [vmem:[%s343 + $0x18] sm:$0xff]
    %v348 = vld [vmem:[%s343 + $0x20] sm:$0xff]
    %v349 = vld [vmem:[%s343 + $0x28] sm:$0xff]
    %v350 = vld [vmem:[%s343 + $0x30] sm:$0xff]
    %v351 = vld [vmem:[%s343 + $0x38] sm:$0xff]
    %v352 = vld [vmem:[%s343 + $0x40] sm:$0xff]
    %v353 = vld [vmem:[%s343 + $0x48] sm:$0xff]
    %v354 = vld [vmem:[%s343 + $0x50] sm:$0xff]
    %v355 = vld [vmem:[%s343 + $0x58] sm:$0xff]
    %v356 = vld [vmem:[%s343 + $0x60] sm:$0xff]
    %v357 = vld [vmem:[%s343 + $0x68] sm:$0xff]
    %v358 = vld [vmem:[%s343 + $0x70] sm:$0xff]
    %v359 = vld [vmem:[%s343 + $0x78] sm:$0xff]
    %s360 = scalar_lea.vmem %s6, 1
    %v361 = vld [vmem:[%s360] sm:$0x1]
    %v363 = vlaneseq
    %v364 = vshrl.u32 %v363, 7
    %v365 = vsub.s32 0, %v364
    %v366 = vrot.slane %v361, %v365
    %368 = vmatprep.subr.mxu0 0.0
    %369 = vmatpush1.msra.mxu0 %v344
    %370 = vmatprep.subr.mxu0 0.0
    %371 = vmatpush1.msra.mxu0 %v345
    %372 = vmatprep.subr.mxu0 0.0
    %373 = vmatpush1.msra.mxu0 %v346
    %374 = vmatprep.subr.mxu0 0.0
    %375 = vmatpush1.msra.mxu0 %v347
    %376 = vmatprep.subr.mxu0 0.0
    %377 = vmatpush1.msra.mxu0 %v348
    %378 = vmatprep.subr.mxu0 0.0
    %379 = vmatpush1.msra.mxu0 %v349
    %380 = vmatprep.subr.mxu0 0.0
    %381 = vmatpush1.msra.mxu0 %v350
    %382 = vmatprep.subr.mxu0 0.0
    %383 = vmatpush1.msra.mxu0 %v351
    %384 = vmatprep.subr.mxu0 0.0
    %385 = vmatpush1.msra.mxu0 %v352
    %386 = vmatprep.subr.mxu0 0.0
    %387 = vmatpush1.msra.mxu0 %v353
    %388 = vmatprep.subr.mxu0 0.0
    %389 = vmatpush1.msra.mxu0 %v354
    %390 = vmatprep.subr.mxu0 0.0
    %391 = vmatpush1.msra.mxu0 %v355
    %392 = vmatprep.subr.mxu0 0.0
    %393 = vmatpush1.msra.mxu0 %v356
    %394 = vmatprep.subr.mxu0 0.0
    %395 = vmatpush1.msra.mxu0 %v357
    %396 = vmatprep.subr.mxu0 0.0
    %397 = vmatpush1.msra.mxu0 %v358
    %398 = vmatprep.subr.mxu0 0.0
    %399 = vmatpush1.msra.mxu0 %v359
    %400 = vmatprep.subr.mxu0 0.0
    %401 = vmatpush1.msra.mxu0 0.0
    %402 = vmatprep.subr.mxu0 0.0
    %403 = vmatpush1.msra.mxu0 0.0
    %404 = vmatprep.subr.mxu0 0.0
    %405 = vmatpush1.msra.mxu0 0.0
    %406 = vmatprep.subr.mxu0 0.0
    %407 = vmatpush1.msra.mxu0 0.0
    %408 = vmatprep.subr.mxu0 0.0
    %409 = vmatpush1.msra.mxu0 0.0
    %410 = vmatprep.subr.mxu0 0.0
    %411 = vmatpush1.msra.mxu0 0.0
    %412 = vmatprep.subr.mxu0 0.0
    %413 = vmatpush1.msra.mxu0 0.0
    %414 = vmatprep.subr.mxu0 0.0
    %415 = vmatpush1.msra.mxu0 0.0
    %416 = vmatprep.subr.mxu0 0.0
    %417 = vmatpush1.msra.mxu0 0.0
    %418 = vmatprep.subr.mxu0 0.0
    %419 = vmatpush1.msra.mxu0 0.0
    %420 = vmatprep.subr.mxu0 0.0
    %421 = vmatpush1.msra.mxu0 0.0
    %422 = vmatprep.subr.mxu0 0.0
    %423 = vmatpush1.msra.mxu0 0.0
    %424 = vmatprep.subr.mxu0 0.0
    %425 = vmatpush1.msra.mxu0 0.0
    %426 = vmatprep.subr.mxu0 0.0
    %427 = vmatpush1.msra.mxu0 0.0
    %428 = vmatprep.subr.mxu0 0.0
    %429 = vmatpush1.msra.mxu0 0.0
    %430 = vmatprep.subr.mxu0 0.0
    %431 = vmatpush1.msra.mxu0 0.0
    %432 = vmatprep.mubr.f32.mxu0 0.0
    %433 = vmatmul.mubr.f32.gmra.mrb[0].mxu0 %v341
    %v434 = vpop.f32.mrb[0].mxu0
    %v435 = vadd.f32 %v366, %v434
    %v436 = vpop.f32.mrb[0].mxu0
    %437 = vmatprep.mubr.f32.mxu0 0.0
    %438 = vmatmul.mubr.f32.gmra.mrb[0].mxu0 %v342
    %v439 = vpop.f32.mrb[0].mxu0
    %v440 = vadd.f32 %v366, %v439
    %v441 = vpop.f32.mrb[0].mxu0
    %442 = vdwg.mxu0
    %v443 = vmax.f32 %v435, 0.0
    %v444 = vmax.f32 %v440, 0.0
    %s445 = scalar_lea.vmem [#allocation2], 256
    %v446 = vld [vmem:[%s445] sm:$0xff]
    %v447 = vld [vmem:[%s445 + $0x8] sm:$0xff]
    %v448 = vld [vmem:[%s445 + $0x10] sm:$0xff]
    %v449 = vld [vmem:[%s445 + $0x18] sm:$0xff]
    %v450 = vld [vmem:[%s445 + $0x20] sm:$0xff]
    %v451 = vld [vmem:[%s445 + $0x28] sm:$0xff]
    %v452 = vld [vmem:[%s445 + $0x30] sm:$0xff]
    %v453 = vld [vmem:[%s445 + $0x38] sm:$0xff]
    %v454 = vld [vmem:[%s445 + $0x40] sm:$0xff]
    %v455 = vld [vmem:[%s445 + $0x48] sm:$0xff]
    %v456 = vld [vmem:[%s445 + $0x50] sm:$0xff]
    %v457 = vld [vmem:[%s445 + $0x58] sm:$0xff]
    %v458 = vld [vmem:[%s445 + $0x60] sm:$0xff]
    %v459 = vld [vmem:[%s445 + $0x68] sm:$0xff]
    %v460 = vld [vmem:[%s445 + $0x70] sm:$0xff]
    %v461 = vld [vmem:[%s445 + $0x78] sm:$0xff]
    %s462 = scalar_lea.vmem %s6, 2
    %v463 = vld [vmem:[%s462] sm:$0x1]
    %v465 = vlaneseq
    %v466 = vshrl.u32 %v465, 7
    %v467 = vsub.s32 0, %v466
    %v468 = vrot.slane %v463, %v467
    %470 = vmatprep.subr.mxu0 0.0
    %471 = vmatpush1.msra.mxu0 %v446
    %472 = vmatprep.subr.mxu0 0.0
    %473 = vmatpush1.msra.mxu0 %v447
    %474 = vmatprep.subr.mxu0 0.0
    %475 = vmatpush1.msra.mxu0 %v448
    %476 = vmatprep.subr.mxu0 0.0
    %477 = vmatpush1.msra.mxu0 %v449
    %478 = vmatprep.subr.mxu0 0.0
    %479 = vmatpush1.msra.mxu0 %v450
    %480 = vmatprep.subr.mxu0 0.0
    %481 = vmatpush1.msra.mxu0 %v451
    %482 = vmatprep.subr.mxu0 0.0
    %483 = vmatpush1.msra.mxu0 %v452
    %484 = vmatprep.subr.mxu0 0.0
    %485 = vmatpush1.msra.mxu0 %v453
    %486 = vmatprep.subr.mxu0 0.0
    %487 = vmatpush1.msra.mxu0 %v454
    %488 = vmatprep.subr.mxu0 0.0
    %489 = vmatpush1.msra.mxu0 %v455
    %490 = vmatprep.subr.mxu0 0.0
    %491 = vmatpush1.msra.mxu0 %v456
    %492 = vmatprep.subr.mxu0 0.0
    %493 = vmatpush1.msra.mxu0 %v457
    %494 = vmatprep.subr.mxu0 0.0
    %495 = vmatpush1.msra.mxu0 %v458
    %496 = vmatprep.subr.mxu0 0.0
    %497 = vmatpush1.msra.mxu0 %v459
    %498 = vmatprep.subr.mxu0 0.0
    %499 = vmatpush1.msra.mxu0 %v460
    %500 = vmatprep.subr.mxu0 0.0
    %501 = vmatpush1.msra.mxu0 %v461
    %502 = vmatprep.subr.mxu0 0.0
    %503 = vmatpush1.msra.mxu0 0.0
    %504 = vmatprep.subr.mxu0 0.0
    %505 = vmatpush1.msra.mxu0 0.0
    %506 = vmatprep.subr.mxu0 0.0
    %507 = vmatpush1.msra.mxu0 0.0
    %508 = vmatprep.subr.mxu0 0.0
    %509 = vmatpush1.msra.mxu0 0.0
    %510 = vmatprep.subr.mxu0 0.0
    %511 = vmatpush1.msra.mxu0 0.0
    %512 = vmatprep.subr.mxu0 0.0
    %513 = vmatpush1.msra.mxu0 0.0
    %514 = vmatprep.subr.mxu0 0.0
    %515 = vmatpush1.msra.mxu0 0.0
    %516 = vmatprep.subr.mxu0 0.0
    %517 = vmatpush1.msra.mxu0 0.0
    %518 = vmatprep.subr.mxu0 0.0
    %519 = vmatpush1.msra.mxu0 0.0
    %520 = vmatprep.subr.mxu0 0.0
    %521 = vmatpush1.msra.mxu0 0.0
    %522 = vmatprep.subr.mxu0 0.0
    %523 = vmatpush1.msra.mxu0 0.0
    %524 = vmatprep.subr.mxu0 0.0
    %525 = vmatpush1.msra.mxu0 0.0
    %526 = vmatprep.subr.mxu0 0.0
    %527 = vmatpush1.msra.mxu0 0.0
    %528 = vmatprep.subr.mxu0 0.0
    %529 = vmatpush1.msra.mxu0 0.0
    %530 = vmatprep.subr.mxu0 0.0
    %531 = vmatpush1.msra.mxu0 0.0
    %532 = vmatprep.subr.mxu0 0.0
    %533 = vmatpush1.msra.mxu0 0.0
    %534 = vmatprep.mubr.f32.mxu0 0.0
    %535 = vmatmul.mubr.f32.gmra.mrb[0].mxu0 %v443
    %v536 = vpop.f32.mrb[0].mxu0
    %v537 = vadd.f32 %v468, %v536
    %v538 = vpop.f32.mrb[0].mxu0
    %539 = vmatprep.mubr.f32.mxu0 0.0
    %540 = vmatmul.mubr.f32.gmra.mrb[0].mxu0 %v444
    %v541 = vpop.f32.mrb[0].mxu0
    %v542 = vadd.f32 %v468, %v541
    %v543 = vpop.f32.mrb[0].mxu0
    %544 = vdwg.mxu0
    %v545 = vmax.f32 %v537, 0.0
    %v546 = vmax.f32 %v542, 0.0
    %s547 = scalar_lea.vmem [#allocation2], 384
    %v548 = vld [vmem:[%s547] sm:$0xff]
    %v549 = vld [vmem:[%s547 + $0x8] sm:$0xff]
    %v550 = vld [vmem:[%s547 + $0x10] sm:$0xff]
    %v551 = vld [vmem:[%s547 + $0x18] sm:$0xff]
    %v552 = vld [vmem:[%s547 + $0x20] sm:$0xff]
    %v553 = vld [vmem:[%s547 + $0x28] sm:$0xff]
    %v554 = vld [vmem:[%s547 + $0x30] sm:$0xff]
    %v555 = vld [vmem:[%s547 + $0x38] sm:$0xff]
    %v556 = vld [vmem:[%s547 + $0x40] sm:$0xff]
    %v557 = vld [vmem:[%s547 + $0x48] sm:$0xff]
    %v558 = vld [vmem:[%s547 + $0x50] sm:$0xff]
    %v559 = vld [vmem:[%s547 + $0x58] sm:$0xff]
    %v560 = vld [vmem:[%s547 + $0x60] sm:$0xff]
    %v561 = vld [vmem:[%s547 + $0x68] sm:$0xff]
    %v562 = vld [vmem:[%s547 + $0x70] sm:$0xff]
    %v563 = vld [vmem:[%s547 + $0x78] sm:$0xff]
    %s564 = scalar_lea.vmem %s6, 3
    %v565 = vld [vmem:[%s564] sm:$0x1]
    %v567 = vlaneseq
    %v568 = vshrl.u32 %v567, 7
    %v569 = vsub.s32 0, %v568
    %v570 = vrot.slane %v565, %v569
    %572 = vmatprep.subr.mxu0 0.0
    %573 = vmatpush1.msra.mxu0 %v548
    %574 = vmatprep.subr.mxu0 0.0
    %575 = vmatpush1.msra.mxu0 %v549
    %576 = vmatprep.subr.mxu0 0.0
    %577 = vmatpush1.msra.mxu0 %v550
    %578 = vmatprep.subr.mxu0 0.0
    %579 = vmatpush1.msra.mxu0 %v551
    %580 = vmatprep.subr.mxu0 0.0
    %581 = vmatpush1.msra.mxu0 %v552
    %582 = vmatprep.subr.mxu0 0.0
    %583 = vmatpush1.msra.mxu0 %v553
    %584 = vmatprep.subr.mxu0 0.0
    %585 = vmatpush1.msra.mxu0 %v554
    %586 = vmatprep.subr.mxu0 0.0
    %587 = vmatpush1.msra.mxu0 %v555
    %588 = vmatprep.subr.mxu0 0.0
    %589 = vmatpush1.msra.mxu0 %v556
    %590 = vmatprep.subr.mxu0 0.0
    %591 = vmatpush1.msra.mxu0 %v557
    %592 = vmatprep.subr.mxu0 0.0
    %593 = vmatpush1.msra.mxu0 %v558
    %594 = vmatprep.subr.mxu0 0.0
    %595 = vmatpush1.msra.mxu0 %v559
    %596 = vmatprep.subr.mxu0 0.0
    %597 = vmatpush1.msra.mxu0 %v560
    %598 = vmatprep.subr.mxu0 0.0
    %599 = vmatpush1.msra.mxu0 %v561
    %600 = vmatprep.subr.mxu0 0.0
    %601 = vmatpush1.msra.mxu0 %v562
    %602 = vmatprep.subr.mxu0 0.0
    %603 = vmatpush1.msra.mxu0 %v563
    %604 = vmatprep.subr.mxu0 0.0
    %605 = vmatpush1.msra.mxu0 0.0
    %606 = vmatprep.subr.mxu0 0.0
    %607 = vmatpush1.msra.mxu0 0.0
    %608 = vmatprep.subr.mxu0 0.0
    %609 = vmatpush1.msra.mxu0 0.0
    %610 = vmatprep.subr.mxu0 0.0
    %611 = vmatpush1.msra.mxu0 0.0
    %612 = vmatprep.subr.mxu0 0.0
    %613 = vmatpush1.msra.mxu0 0.0
    %614 = vmatprep.subr.mxu0 0.0
    %615 = vmatpush1.msra.mxu0 0.0
    %616 = vmatprep.subr.mxu0 0.0
    %617 = vmatpush1.msra.mxu0 0.0
    %618 = vmatprep.subr.mxu0 0.0
    %619 = vmatpush1.msra.mxu0 0.0
    %620 = vmatprep.subr.mxu0 0.0
    %621 = vmatpush1.msra.mxu0 0.0
    %622 = vmatprep.subr.mxu0 0.0
    %623 = vmatpush1.msra.mxu0 0.0
    %624 = vmatprep.subr.mxu0 0.0
    %625 = vmatpush1.msra.mxu0 0.0
    %626 = vmatprep.subr.mxu0 0.0
    %627 = vmatpush1.msra.mxu0 0.0
    %628 = vmatprep.subr.mxu0 0.0
    %629 = vmatpush1.msra.mxu0 0.0
    %630 = vmatprep.subr.mxu0 0.0
    %631 = vmatpush1.msra.mxu0 0.0
    %632 = vmatprep.subr.mxu0 0.0
    %633 = vmatpush1.msra.mxu0 0.0
    %634 = vmatprep.subr.mxu0 0.0
    %635 = vmatpush1.msra.mxu0 0.0
    %636 = vmatprep.mubr.f32.mxu0 0.0
    %637 = vmatmul.mubr.f32.gmra.mrb[0].mxu0 %v545
    %v638 = vpop.f32.mrb[0].mxu0
    %v639 = vadd.f32 %v570, %v638
    %v640 = vpop.f32.mrb[0].mxu0
    %641 = vmatprep.mubr.f32.mxu0 0.0
    %642 = vmatmul.mubr.f32.gmra.mrb[0].mxu0 %v546
    %v643 = vpop.f32.mrb[0].mxu0
    %v644 = vadd.f32 %v570, %v643
    %v645 = vpop.f32.mrb[0].mxu0
    %646 = vdwg.mxu0
    %v647 = vmax.f32 %v639, 0.0
    %v648 = vmax.f32 %v644, 0.0
    %s649 = scalar_lea.vmem [#allocation2], 512
    %v650 = vld [vmem:[%s649] sm:$0xff]
    %v651 = vld [vmem:[%s649 + $0x8] sm:$0xff]
    %v652 = vld [vmem:[%s649 + $0x10] sm:$0xff]
    %v653 = vld [vmem:[%s649 + $0x18] sm:$0xff]
    %v654 = vld [vmem:[%s649 + $0x20] sm:$0xff]
    %v655 = vld [vmem:[%s649 + $0x28] sm:$0xff]
    %v656 = vld [vmem:[%s649 + $0x30] sm:$0xff]
    %v657 = vld [vmem:[%s649 + $0x38] sm:$0xff]
    %v658 = vld [vmem:[%s649 + $0x40] sm:$0xff]
    %v659 = vld [vmem:[%s649 + $0x48] sm:$0xff]
    %v660 = vld [vmem:[%s649 + $0x50] sm:$0xff]
    %v661 = vld [vmem:[%s649 + $0x58] sm:$0xff]
    %v662 = vld [vmem:[%s649 + $0x60] sm:$0xff]
    %v663 = vld [vmem:[%s649 + $0x68] sm:$0xff]
    %v664 = vld [vmem:[%s649 + $0x70] sm:$0xff]
    %v665 = vld [vmem:[%s649 + $0x78] sm:$0xff]
    %s666 = scalar_lea.vmem %s6, 4
    %v667 = vld [vmem:[%s666] sm:$0x1]
    %v669 = vlaneseq
    %v670 = vshrl.u32 %v669, 7
    %v671 = vsub.s32 0, %v670
    %v672 = vrot.slane %v667, %v671
    %674 = vmatprep.subr.mxu0 0.0
    %675 = vmatpush1.msra.mxu0 %v650
    %676 = vmatprep.subr.mxu0 0.0
    %677 = vmatpush1.msra.mxu0 %v651
    %678 = vmatprep.subr.mxu0 0.0
    %679 = vmatpush1.msra.mxu0 %v652
    %680 = vmatprep.subr.mxu0 0.0
    %681 = vmatpush1.msra.mxu0 %v653
    %682 = vmatprep.subr.mxu0 0.0
    %683 = vmatpush1.msra.mxu0 %v654
    %684 = vmatprep.subr.mxu0 0.0
    %685 = vmatpush1.msra.mxu0 %v655
    %686 = vmatprep.subr.mxu0 0.0
    %687 = vmatpush1.msra.mxu0 %v656
    %688 = vmatprep.subr.mxu0 0.0
    %689 = vmatpush1.msra.mxu0 %v657
    %690 = vmatprep.subr.mxu0 0.0
    %691 = vmatpush1.msra.mxu0 %v658
    %692 = vmatprep.subr.mxu0 0.0
    %693 = vmatpush1.msra.mxu0 %v659
    %694 = vmatprep.subr.mxu0 0.0
    %695 = vmatpush1.msra.mxu0 %v660
    %696 = vmatprep.subr.mxu0 0.0
    %697 = vmatpush1.msra.mxu0 %v661
    %698 = vmatprep.subr.mxu0 0.0
    %699 = vmatpush1.msra.mxu0 %v662
    %700 = vmatprep.subr.mxu0 0.0
    %701 = vmatpush1.msra.mxu0 %v663
    %702 = vmatprep.subr.mxu0 0.0
    %703 = vmatpush1.msra.mxu0 %v664
    %704 = vmatprep.subr.mxu0 0.0
    %705 = vmatpush1.msra.mxu0 %v665
    %706 = vmatprep.subr.mxu0 0.0
    %707 = vmatpush1.msra.mxu0 0.0
    %708 = vmatprep.subr.mxu0 0.0
    %709 = vmatpush1.msra.mxu0 0.0
    %710 = vmatprep.subr.mxu0 0.0
    %711 = vmatpush1.msra.mxu0 0.0
    %712 = vmatprep.subr.mxu0 0.0
    %713 = vmatpush1.msra.mxu0 0.0
    %714 = vmatprep.subr.mxu0 0.0
    %715 = vmatpush1.msra.mxu0 0.0
    %716 = vmatprep.subr.mxu0 0.0
    %717 = vmatpush1.msra.mxu0 0.0
    %718 = vmatprep.subr.mxu0 0.0
    %719 = vmatpush1.msra.mxu0 0.0
    %720 = vmatprep.subr.mxu0 0.0
    %721 = vmatpush1.msra.mxu0 0.0
    %722 = vmatprep.subr.mxu0 0.0
    %723 = vmatpush1.msra.mxu0 0.0
    %724 = vmatprep.subr.mxu0 0.0
    %725 = vmatpush1.msra.mxu0 0.0
    %726 = vmatprep.subr.mxu0 0.0
    %727 = vmatpush1.msra.mxu0 0.0
    %728 = vmatprep.subr.mxu0 0.0
    %729 = vmatpush1.msra.mxu0 0.0
    %730 = vmatprep.subr.mxu0 0.0
    %731 = vmatpush1.msra.mxu0 0.0
    %732 = vmatprep.subr.mxu0 0.0
    %733 = vmatpush1.msra.mxu0 0.0
    %734 = vmatprep.subr.mxu0 0.0
    %735 = vmatpush1.msra.mxu0 0.0
    %736 = vmatprep.subr.mxu0 0.0
    %737 = vmatpush1.msra.mxu0 0.0
    %738 = vmatprep.mubr.f32.mxu0 0.0
    %739 = vmatmul.mubr.f32.gmra.mrb[0].mxu0 %v647
    %v740 = vpop.f32.mrb[0].mxu0
    %v741 = vadd.f32 %v672, %v740
    %v742 = vpop.f32.mrb[0].mxu0
    %743 = vmatprep.mubr.f32.mxu0 0.0
    %744 = vmatmul.mubr.f32.gmra.mrb[0].mxu0 %v648
    %v745 = vpop.f32.mrb[0].mxu0
    %v746 = vadd.f32 %v672, %v745
    %v747 = vpop.f32.mrb[0].mxu0
    %748 = vdwg.mxu0
    %v749 = vmax.f32 %v741, 0.0
    %v750 = vmax.f32 %v746, 0.0
    %s751 = scalar_lea.vmem [#allocation2], 640
    %v752 = vld [vmem:[%s751] sm:$0xff]
    %v753 = vld [vmem:[%s751 + $0x8] sm:$0xff]
    %v754 = vld [vmem:[%s751 + $0x10] sm:$0xff]
    %v755 = vld [vmem:[%s751 + $0x18] sm:$0xff]
    %v756 = vld [vmem:[%s751 + $0x20] sm:$0xff]
    %v757 = vld [vmem:[%s751 + $0x28] sm:$0xff]
    %v758 = vld [vmem:[%s751 + $0x30] sm:$0xff]
    %v759 = vld [vmem:[%s751 + $0x38] sm:$0xff]
    %v760 = vld [vmem:[%s751 + $0x40] sm:$0xff]
    %v761 = vld [vmem:[%s751 + $0x48] sm:$0xff]
    %v762 = vld [vmem:[%s751 + $0x50] sm:$0xff]
    %v763 = vld [vmem:[%s751 + $0x58] sm:$0xff]
    %v764 = vld [vmem:[%s751 + $0x60] sm:$0xff]
    %v765 = vld [vmem:[%s751 + $0x68] sm:$0xff]
    %v766 = vld [vmem:[%s751 + $0x70] sm:$0xff]
    %v767 = vld [vmem:[%s751 + $0x78] sm:$0xff]
    %s768 = scalar_lea.vmem %s6, 5
    %v769 = vld [vmem:[%s768] sm:$0x1]
    %v771 = vlaneseq
    %v772 = vshrl.u32 %v771, 7
    %v773 = vsub.s32 0, %v772
    %v774 = vrot.slane %v769, %v773
    %776 = vmatprep.subr.mxu0 0.0
    %777 = vmatpush1.msra.mxu0 %v752
    %778 = vmatprep.subr.mxu0 0.0
    %779 = vmatpush1.msra.mxu0 %v753
    %780 = vmatprep.subr.mxu0 0.0
    %781 = vmatpush1.msra.mxu0 %v754
    %782 = vmatprep.subr.mxu0 0.0
    %783 = vmatpush1.msra.mxu0 %v755
    %784 = vmatprep.subr.mxu0 0.0
    %785 = vmatpush1.msra.mxu0 %v756
    %786 = vmatprep.subr.mxu0 0.0
    %787 = vmatpush1.msra.mxu0 %v757
    %788 = vmatprep.subr.mxu0 0.0
    %789 = vmatpush1.msra.mxu0 %v758
    %790 = vmatprep.subr.mxu0 0.0
    %791 = vmatpush1.msra.mxu0 %v759
    %792 = vmatprep.subr.mxu0 0.0
    %793 = vmatpush1.msra.mxu0 %v760
    %794 = vmatprep.subr.mxu0 0.0
    %795 = vmatpush1.msra.mxu0 %v761
    %796 = vmatprep.subr.mxu0 0.0
    %797 = vmatpush1.msra.mxu0 %v762
    %798 = vmatprep.subr.mxu0 0.0
    %799 = vmatpush1.msra.mxu0 %v763
    %800 = vmatprep.subr.mxu0 0.0
    %801 = vmatpush1.msra.mxu0 %v764
    %802 = vmatprep.subr.mxu0 0.0
    %803 = vmatpush1.msra.mxu0 %v765
    %804 = vmatprep.subr.mxu0 0.0
    %805 = vmatpush1.msra.mxu0 %v766
    %806 = vmatprep.subr.mxu0 0.0
    %807 = vmatpush1.msra.mxu0 %v767
    %808 = vmatprep.subr.mxu0 0.0
    %809 = vmatpush1.msra.mxu0 0.0
    %810 = vmatprep.subr.mxu0 0.0
    %811 = vmatpush1.msra.mxu0 0.0
    %812 = vmatprep.subr.mxu0 0.0
    %813 = vmatpush1.msra.mxu0 0.0
    %814 = vmatprep.subr.mxu0 0.0
    %815 = vmatpush1.msra.mxu0 0.0
    %816 = vmatprep.subr.mxu0 0.0
    %817 = vmatpush1.msra.mxu0 0.0
    %818 = vmatprep.subr.mxu0 0.0
    %819 = vmatpush1.msra.mxu0 0.0
    %820 = vmatprep.subr.mxu0 0.0
    %821 = vmatpush1.msra.mxu0 0.0
    %822 = vmatprep.subr.mxu0 0.0
    %823 = vmatpush1.msra.mxu0 0.0
    %824 = vmatprep.subr.mxu0 0.0
    %825 = vmatpush1.msra.mxu0 0.0
    %826 = vmatprep.subr.mxu0 0.0
    %827 = vmatpush1.msra.mxu0 0.0
    %828 = vmatprep.subr.mxu0 0.0
    %829 = vmatpush1.msra.mxu0 0.0
    %830 = vmatprep.subr.mxu0 0.0
    %831 = vmatpush1.msra.mxu0 0.0
    %832 = vmatprep.subr.mxu0 0.0
    %833 = vmatpush1.msra.mxu0 0.0
    %834 = vmatprep.subr.mxu0 0.0
    %835 = vmatpush1.msra.mxu0 0.0
    %836 = vmatprep.subr.mxu0 0.0
    %837 = vmatpush1.msra.mxu0 0.0
    %838 = vmatprep.subr.mxu0 0.0
    %839 = vmatpush1.msra.mxu0 0.0
    %840 = vmatprep.mubr.f32.mxu0 0.0
    %841 = vmatmul.mubr.f32.gmra.mrb[0].mxu0 %v749
    %v842 = vpop.f32.mrb[0].mxu0
    %v843 = vadd.f32 %v774, %v842
    %v844 = vpop.f32.mrb[0].mxu0
    %845 = vmatprep.mubr.f32.mxu0 0.0
    %846 = vmatmul.mubr.f32.gmra.mrb[0].mxu0 %v750
    %v847 = vpop.f32.mrb[0].mxu0
    %v848 = vadd.f32 %v774, %v847
    %v849 = vpop.f32.mrb[0].mxu0
    %850 = vdwg.mxu0
    %v851 = vmax.f32 %v843, 0.0
    %v852 = vmax.f32 %v848, 0.0
    %s853 = scalar_lea.vmem [#allocation2], 768
    %v854 = vld [vmem:[%s853] sm:$0xff]
    %v855 = vld [vmem:[%s853 + $0x8] sm:$0xff]
    %v856 = vld [vmem:[%s853 + $0x10] sm:$0xff]
    %v857 = vld [vmem:[%s853 + $0x18] sm:$0xff]
    %v858 = vld [vmem:[%s853 + $0x20] sm:$0xff]
    %v859 = vld [vmem:[%s853 + $0x28] sm:$0xff]
    %v860 = vld [vmem:[%s853 + $0x30] sm:$0xff]
    %v861 = vld [vmem:[%s853 + $0x38] sm:$0xff]
    %v862 = vld [vmem:[%s853 + $0x40] sm:$0xff]
    %v863 = vld [vmem:[%s853 + $0x48] sm:$0xff]
    %v864 = vld [vmem:[%s853 + $0x50] sm:$0xff]
    %v865 = vld [vmem:[%s853 + $0x58] sm:$0xff]
    %v866 = vld [vmem:[%s853 + $0x60] sm:$0xff]
    %v867 = vld [vmem:[%s853 + $0x68] sm:$0xff]
    %v868 = vld [vmem:[%s853 + $0x70] sm:$0xff]
    %v869 = vld [vmem:[%s853 + $0x78] sm:$0xff]
    %s870 = scalar_lea.vmem %s6, 6
    %v871 = vld [vmem:[%s870] sm:$0x1]
    %v873 = vlaneseq
    %v874 = vshrl.u32 %v873, 7
    %v875 = vsub.s32 0, %v874
    %v876 = vrot.slane %v871, %v875
    %878 = vmatprep.subr.mxu0 0.0
    %879 = vmatpush1.msra.mxu0 %v854
    %880 = vmatprep.subr.mxu0 0.0
    %881 = vmatpush1.msra.mxu0 %v855
    %882 = vmatprep.subr.mxu0 0.0
    %883 = vmatpush1.msra.mxu0 %v856
    %884 = vmatprep.subr.mxu0 0.0
    %885 = vmatpush1.msra.mxu0 %v857
    %886 = vmatprep.subr.mxu0 0.0
    %887 = vmatpush1.msra.mxu0 %v858
    %888 = vmatprep.subr.mxu0 0.0
    %889 = vmatpush1.msra.mxu0 %v859
    %890 = vmatprep.subr.mxu0 0.0
    %891 = vmatpush1.msra.mxu0 %v860
    %892 = vmatprep.subr.mxu0 0.0
    %893 = vmatpush1.msra.mxu0 %v861
    %894 = vmatprep.subr.mxu0 0.0
    %895 = vmatpush1.msra.mxu0 %v862
    %896 = vmatprep.subr.mxu0 0.0
    %897 = vmatpush1.msra.mxu0 %v863
    %898 = vmatprep.subr.mxu0 0.0
    %899 = vmatpush1.msra.mxu0 %v864
    %900 = vmatprep.subr.mxu0 0.0
    %901 = vmatpush1.msra.mxu0 %v865
    %902 = vmatprep.subr.mxu0 0.0
    %903 = vmatpush1.msra.mxu0 %v866
    %904 = vmatprep.subr.mxu0 0.0
    %905 = vmatpush1.msra.mxu0 %v867
    %906 = vmatprep.subr.mxu0 0.0
    %907 = vmatpush1.msra.mxu0 %v868
    %908 = vmatprep.subr.mxu0 0.0
    %909 = vmatpush1.msra.mxu0 %v869
    %910 = vmatprep.subr.mxu0 0.0
    %911 = vmatpush1.msra.mxu0 0.0
    %912 = vmatprep.subr.mxu0 0.0
    %913 = vmatpush1.msra.mxu0 0.0
    %914 = vmatprep.subr.mxu0 0.0
    %915 = vmatpush1.msra.mxu0 0.0
    %916 = vmatprep.subr.mxu0 0.0
    %917 = vmatpush1.msra.mxu0 0.0
    %918 = vmatprep.subr.mxu0 0.0
    %919 = vmatpush1.msra.mxu0 0.0
    %920 = vmatprep.subr.mxu0 0.0
    %921 = vmatpush1.msra.mxu0 0.0
    %922 = vmatprep.subr.mxu0 0.0
    %923 = vmatpush1.msra.mxu0 0.0
    %924 = vmatprep.subr.mxu0 0.0
    %925 = vmatpush1.msra.mxu0 0.0
    %926 = vmatprep.subr.mxu0 0.0
    %927 = vmatpush1.msra.mxu0 0.0
    %928 = vmatprep.subr.mxu0 0.0
    %929 = vmatpush1.msra.mxu0 0.0
    %930 = vmatprep.subr.mxu0 0.0
    %931 = vmatpush1.msra.mxu0 0.0
    %932 = vmatprep.subr.mxu0 0.0
    %933 = vmatpush1.msra.mxu0 0.0
    %934 = vmatprep.subr.mxu0 0.0
    %935 = vmatpush1.msra.mxu0 0.0
    %936 = vmatprep.subr.mxu0 0.0
    %937 = vmatpush1.msra.mxu0 0.0
    %938 = vmatprep.subr.mxu0 0.0
    %939 = vmatpush1.msra.mxu0 0.0
    %940 = vmatprep.subr.mxu0 0.0
    %941 = vmatpush1.msra.mxu0 0.0
    %942 = vmatprep.mubr.f32.mxu0 0.0
    %943 = vmatmul.mubr.f32.gmra.mrb[0].mxu0 %v851
    %v944 = vpop.f32.mrb[0].mxu0
    %v945 = vadd.f32 %v876, %v944
    %v946 = vpop.f32.mrb[0].mxu0
    %947 = vmatprep.mubr.f32.mxu0 0.0
    %948 = vmatmul.mubr.f32.gmra.mrb[0].mxu0 %v852
    %v949 = vpop.f32.mrb[0].mxu0
    %v950 = vadd.f32 %v876, %v949
    %v951 = vpop.f32.mrb[0].mxu0
    %952 = vdwg.mxu0
    %v953 = vmax.f32 %v945, 0.0
    %v954 = vmax.f32 %v950, 0.0
    %v955 = vld [vmem:[%s7] sm:$0xff]
    %v956 = vld [vmem:[%s7 + $0x8] sm:$0xff]
    %v957 = vld [vmem:[%s7 + $0x10] sm:$0xff]
    %v958 = vld [vmem:[%s7 + $0x18] sm:$0xff]
    %v959 = vld [vmem:[%s7 + $0x20] sm:$0xff]
    %v960 = vld [vmem:[%s7 + $0x28] sm:$0xff]
    %v961 = vld [vmem:[%s7 + $0x30] sm:$0xff]
    %v962 = vld [vmem:[%s7 + $0x38] sm:$0xff]
    %v963 = vld [vmem:[%s7 + $0x40] sm:$0xff]
    %v964 = vld [vmem:[%s7 + $0x48] sm:$0xff]
    %v965 = vld [vmem:[%s7 + $0x50] sm:$0xff]
    %v966 = vld [vmem:[%s7 + $0x58] sm:$0xff]
    %v967 = vld [vmem:[%s7 + $0x60] sm:$0xff]
    %v968 = vld [vmem:[%s7 + $0x68] sm:$0xff]
    %v969 = vld [vmem:[%s7 + $0x70] sm:$0xff]
    %v970 = vld [vmem:[%s7 + $0x78] sm:$0xff]
    %971 = vmatprep.subr.mxu0 0.0
    %972 = vmatpush1.msra.mxu0 %v955
    %973 = vmatprep.subr.mxu0 0.0
    %974 = vmatpush1.msra.mxu0 %v956
    %975 = vmatprep.subr.mxu0 0.0
    %976 = vmatpush1.msra.mxu0 %v957
    %977 = vmatprep.subr.mxu0 0.0
    %978 = vmatpush1.msra.mxu0 %v958
    %979 = vmatprep.subr.mxu0 0.0
    %980 = vmatpush1.msra.mxu0 %v959
    %981 = vmatprep.subr.mxu0 0.0
    %982 = vmatpush1.msra.mxu0 %v960
    %983 = vmatprep.subr.mxu0 0.0
    %984 = vmatpush1.msra.mxu0 %v961
    %985 = vmatprep.subr.mxu0 0.0
    %986 = vmatpush1.msra.mxu0 %v962
    %987 = vmatprep.subr.mxu0 0.0
    %988 = vmatpush1.msra.mxu0 %v963
    %989 = vmatprep.subr.mxu0 0.0
    %990 = vmatpush1.msra.mxu0 %v964
    %991 = vmatprep.subr.mxu0 0.0
    %992 = vmatpush1.msra.mxu0 %v965
    %993 = vmatprep.subr.mxu0 0.0
    %994 = vmatpush1.msra.mxu0 %v966
    %995 = vmatprep.subr.mxu0 0.0
    %996 = vmatpush1.msra.mxu0 %v967
    %997 = vmatprep.subr.mxu0 0.0
    %998 = vmatpush1.msra.mxu0 %v968
    %999 = vmatprep.subr.mxu0 0.0
    %1000 = vmatpush1.msra.mxu0 %v969
    %1001 = vmatprep.subr.mxu0 0.0
    %1002 = vmatpush1.msra.mxu0 %v970
    %1003 = vmatprep.subr.mxu0 0.0
    %1004 = vmatpush1.msra.mxu0 0.0
    %1005 = vmatprep.subr.mxu0 0.0
    %1006 = vmatpush1.msra.mxu0 0.0
    %1007 = vmatprep.subr.mxu0 0.0
    %1008 = vmatpush1.msra.mxu0 0.0
    %1009 = vmatprep.subr.mxu0 0.0
    %1010 = vmatpush1.msra.mxu0 0.0
    %1011 = vmatprep.subr.mxu0 0.0
    %1012 = vmatpush1.msra.mxu0 0.0
    %1013 = vmatprep.subr.mxu0 0.0
    %1014 = vmatpush1.msra.mxu0 0.0
    %1015 = vmatprep.subr.mxu0 0.0
    %1016 = vmatpush1.msra.mxu0 0.0
    %1017 = vmatprep.subr.mxu0 0.0
    %1018 = vmatpush1.msra.mxu0 0.0
    %1019 = vmatprep.subr.mxu0 0.0
    %1020 = vmatpush1.msra.mxu0 0.0
    %1021 = vmatprep.subr.mxu0 0.0
    %1022 = vmatpush1.msra.mxu0 0.0
    %1023 = vmatprep.subr.mxu0 0.0
    %1024 = vmatpush1.msra.mxu0 0.0
    %1025 = vmatprep.subr.mxu0 0.0
    %1026 = vmatpush1.msra.mxu0 0.0
    %1027 = vmatprep.subr.mxu0 0.0
    %1028 = vmatpush1.msra.mxu0 0.0
    %1029 = vmatprep.subr.mxu0 0.0
    %1030 = vmatpush1.msra.mxu0 0.0
    %1031 = vmatprep.subr.mxu0 0.0
    %1032 = vmatpush1.msra.mxu0 0.0
    %1033 = vmatprep.subr.mxu0 0.0
    %1034 = vmatpush1.msra.mxu0 0.0
    %1035 = vmatprep.mubr.f32.mxu0 0.0
    %1036 = vmatmul.mubr.f32.gmra.mrb[0].mxu0 %v953
    %v1037 = vpop.f32.mrb[0].mxu0
    %v1038 = vadd.f32 %v235, %v1037
    %v1039 = vpop.f32.mrb[0].mxu0
    %1040 = vmatprep.mubr.f32.mxu0 0.0
    %1041 = vmatmul.mubr.f32.gmra.mrb[0].mxu0 %v954
    %v1042 = vpop.f32.mrb[0].mxu0
    %v1043 = vadd.f32 %v240, %v1042
    %v1044 = vpop.f32.mrb[0].mxu0
    %1045 = vdwg.mxu0
    %v1046 = vmax.f32 %v1038, 0.0
    %v1047 = vmax.f32 %v1043, 0.0
    %v1048 = vld [vmem:[%s8] sm:$0xff]
    %v1049 = vld [vmem:[%s8 + $0x8] sm:$0xff]
    %v1050 = vld [vmem:[%s8 + $0x10] sm:$0xff]
    %v1051 = vld [vmem:[%s8 + $0x18] sm:$0xff]
    %v1052 = vld [vmem:[%s8 + $0x20] sm:$0xff]
    %v1053 = vld [vmem:[%s8 + $0x28] sm:$0xff]
    %v1054 = vld [vmem:[%s8 + $0x30] sm:$0xff]
    %v1055 = vld [vmem:[%s8 + $0x38] sm:$0xff]
    %v1056 = vld [vmem:[%s9] sm:$0x1]
    %v1058 = vlaneseq
    %v1059 = vshrl.u32 %v1058, 7
    %v1060 = vsub.s32 0, %v1059
    %v1061 = vrot.slane %v1056, %v1060
    %vm1063 = vcmask 523264
    %v1065 = vsel %vm1063, %v1046, 0
    %v1068 = vsel %vm1063, %v1047, 0
    %1070 = vmatprep.subr.mxu0 0.0
    %1071 = vmatpush1.msra.mxu0 %v1048
    %1072 = vmatprep.subr.mxu0 0.0
    %1073 = vmatpush1.msra.mxu0 %v1049
    %1074 = vmatprep.subr.mxu0 0.0
    %1075 = vmatpush1.msra.mxu0 %v1050
    %1076 = vmatprep.subr.mxu0 0.0
    %1077 = vmatpush1.msra.mxu0 %v1051
    %1078 = vmatprep.subr.mxu0 0.0
    %1079 = vmatpush1.msra.mxu0 %v1052
    %1080 = vmatprep.subr.mxu0 0.0
    %1081 = vmatpush1.msra.mxu0 %v1053
    %1082 = vmatprep.subr.mxu0 0.0
    %1083 = vmatpush1.msra.mxu0 %v1054
    %1084 = vmatprep.subr.mxu0 0.0
    %1085 = vmatpush1.msra.mxu0 %v1055
    %1086 = vmatprep.subr.mxu0 0.0
    %1087 = vmatpush1.msra.mxu0 0.0
    %1088 = vmatprep.subr.mxu0 0.0
    %1089 = vmatpush1.msra.mxu0 0.0
    %1090 = vmatprep.subr.mxu0 0.0
    %1091 = vmatpush1.msra.mxu0 0.0
    %1092 = vmatprep.subr.mxu0 0.0
    %1093 = vmatpush1.msra.mxu0 0.0
    %1094 = vmatprep.subr.mxu0 0.0
    %1095 = vmatpush1.msra.mxu0 0.0
    %1096 = vmatprep.subr.mxu0 0.0
    %1097 = vmatpush1.msra.mxu0 0.0
    %1098 = vmatprep.subr.mxu0 0.0
    %1099 = vmatpush1.msra.mxu0 0.0
    %1100 = vmatprep.subr.mxu0 0.0
    %1101 = vmatpush1.msra.mxu0 0.0
    %1102 = vmatprep.subr.mxu0 0.0
    %1103 = vmatpush1.msra.mxu0 0.0
    %1104 = vmatprep.subr.mxu0 0.0
    %1105 = vmatpush1.msra.mxu0 0.0
    %1106 = vmatprep.subr.mxu0 0.0
    %1107 = vmatpush1.msra.mxu0 0.0
    %1108 = vmatprep.subr.mxu0 0.0
    %1109 = vmatpush1.msra.mxu0 0.0
    %1110 = vmatprep.subr.mxu0 0.0
    %1111 = vmatpush1.msra.mxu0 0.0
    %1112 = vmatprep.subr.mxu0 0.0
    %1113 = vmatpush1.msra.mxu0 0.0
    %1114 = vmatprep.subr.mxu0 0.0
    %1115 = vmatpush1.msra.mxu0 0.0
    %1116 = vmatprep.subr.mxu0 0.0
    %1117 = vmatpush1.msra.mxu0 0.0
    %1118 = vmatprep.subr.mxu0 0.0
    %1119 = vmatpush1.msra.mxu0 0.0
    %1120 = vmatprep.subr.mxu0 0.0
    %1121 = vmatpush1.msra.mxu0 0.0
    %1122 = vmatprep.subr.mxu0 0.0
    %1123 = vmatpush1.msra.mxu0 0.0
    %1124 = vmatprep.subr.mxu0 0.0
    %1125 = vmatpush1.msra.mxu0 0.0
    %1126 = vmatprep.subr.mxu0 0.0
    %1127 = vmatpush1.msra.mxu0 0.0
    %1128 = vmatprep.subr.mxu0 0.0
    %1129 = vmatpush1.msra.mxu0 0.0
    %1130 = vmatprep.subr.mxu0 0.0
    %1131 = vmatpush1.msra.mxu0 0.0
    %1132 = vmatprep.subr.mxu0 0.0
    %1133 = vmatpush1.msra.mxu0 0.0
    %1134 = vmatprep.mubr.f32.mxu0 0.0
    %1135 = vmatmul.mubr.f32.gmra.mrb[0].mxu0 %v1065
    %v1136 = vpop.f32.mrb[0].mxu0
    %v1137 = vadd.f32 %v1061, %v1136
    %v1138 = vpop.f32.mrb[0].mxu0
    %1139 = vmatprep.mubr.f32.mxu0 0.0
    %1140 = vmatmul.mubr.f32.gmra.mrb[0].mxu0 %v1068
    %v1141 = vpop.f32.mrb[0].mxu0
    %v1142 = vadd.f32 %v1061, %v1141
    %v1143 = vpop.f32.mrb[0].mxu0
    %1144 = vdwg.mxu0
    %v1145 = vmax.f32 %v1137, 0.0
    %v1146 = vmax.f32 %v1142, 0.0
    %v1147 = vld [vmem:[%s10] sm:$0xff]
    %v1148 = vld [vmem:[%s10 + $0x8] sm:$0xff]
    %v1149 = vld [vmem:[%s10 + $0x10] sm:$0xff]
    %v1150 = vld [vmem:[%s10 + $0x18] sm:$0xff]
    %v1151 = vld [vmem:[%s10 + $0x20] sm:$0xff]
    %v1152 = vld [vmem:[%s10 + $0x28] sm:$0xff]
    %v1153 = vld [vmem:[%s10 + $0x30] sm:$0xff]
    %v1154 = vld [vmem:[%s10 + $0x38] sm:$0xff]
    %v1155 = vld [vmem:[%s10 + $0x40] sm:$0xff]
    %v1156 = vld [vmem:[%s10 + $0x48] sm:$0xff]
    %v1157 = vld [vmem:[%s10 + $0x50] sm:$0xff]
    %v1158 = vld [vmem:[%s10 + $0x58] sm:$0xff]
    %v1159 = vld [vmem:[%s10 + $0x60] sm:$0xff]
    %v1160 = vld [vmem:[%s10 + $0x68] sm:$0xff]
    %v1161 = vld [vmem:[%s10 + $0x70] sm:$0xff]
    %v1162 = vld [vmem:[%s10 + $0x78] sm:$0xff]
    %v1163 = vld [vmem:[%s11] sm:$0x1]
    %v1165 = vlaneseq
    %v1166 = vshrl.u32 %v1165, 7
    %v1167 = vsub.s32 0, %v1166
    %v1168 = vrot.slane %v1163, %v1167
    %1170 = vmatprep.subr.mxu0 0.0
    %1171 = vmatpush1.msra.mxu0 %v1147
    %1172 = vmatprep.subr.mxu0 0.0
    %1173 = vmatpush1.msra.mxu0 %v1148
    %1174 = vmatprep.subr.mxu0 0.0
    %1175 = vmatpush1.msra.mxu0 %v1149
    %1176 = vmatprep.subr.mxu0 0.0
    %1177 = vmatpush1.msra.mxu0 %v1150
    %1178 = vmatprep.subr.mxu0 0.0
    %1179 = vmatpush1.msra.mxu0 %v1151
    %1180 = vmatprep.subr.mxu0 0.0
    %1181 = vmatpush1.msra.mxu0 %v1152
    %1182 = vmatprep.subr.mxu0 0.0
    %1183 = vmatpush1.msra.mxu0 %v1153
    %1184 = vmatprep.subr.mxu0 0.0
    %1185 = vmatpush1.msra.mxu0 %v1154
    %1186 = vmatprep.subr.mxu0 0.0
    %1187 = vmatpush1.msra.mxu0 %v1155
    %1188 = vmatprep.subr.mxu0 0.0
    %1189 = vmatpush1.msra.mxu0 %v1156
    %1190 = vmatprep.subr.mxu0 0.0
    %1191 = vmatpush1.msra.mxu0 %v1157
    %1192 = vmatprep.subr.mxu0 0.0
    %1193 = vmatpush1.msra.mxu0 %v1158
    %1194 = vmatprep.subr.mxu0 0.0
    %1195 = vmatpush1.msra.mxu0 %v1159
    %1196 = vmatprep.subr.mxu0 0.0
    %1197 = vmatpush1.msra.mxu0 %v1160
    %1198 = vmatprep.subr.mxu0 0.0
    %1199 = vmatpush1.msra.mxu0 %v1161
    %1200 = vmatprep.subr.mxu0 0.0
    %1201 = vmatpush1.msra.mxu0 %v1162
    %1202 = vmatprep.subr.mxu0 0.0
    %1203 = vmatpush1.msra.mxu0 0.0
    %1204 = vmatprep.subr.mxu0 0.0
    %1205 = vmatpush1.msra.mxu0 0.0
    %1206 = vmatprep.subr.mxu0 0.0
    %1207 = vmatpush1.msra.mxu0 0.0
    %1208 = vmatprep.subr.mxu0 0.0
    %1209 = vmatpush1.msra.mxu0 0.0
    %1210 = vmatprep.subr.mxu0 0.0
    %1211 = vmatpush1.msra.mxu0 0.0
    %1212 = vmatprep.subr.mxu0 0.0
    %1213 = vmatpush1.msra.mxu0 0.0
    %1214 = vmatprep.subr.mxu0 0.0
    %1215 = vmatpush1.msra.mxu0 0.0
    %1216 = vmatprep.subr.mxu0 0.0
    %1217 = vmatpush1.msra.mxu0 0.0
    %1218 = vmatprep.subr.mxu0 0.0
    %1219 = vmatpush1.msra.mxu0 0.0
    %1220 = vmatprep.subr.mxu0 0.0
    %1221 = vmatpush1.msra.mxu0 0.0
    %1222 = vmatprep.subr.mxu0 0.0
    %1223 = vmatpush1.msra.mxu0 0.0
    %1224 = vmatprep.subr.mxu0 0.0
    %1225 = vmatpush1.msra.mxu0 0.0
    %1226 = vmatprep.subr.mxu0 0.0
    %1227 = vmatpush1.msra.mxu0 0.0
    %1228 = vmatprep.subr.mxu0 0.0
    %1229 = vmatpush1.msra.mxu0 0.0
    %1230 = vmatprep.subr.mxu0 0.0
    %1231 = vmatpush1.msra.mxu0 0.0
    %1232 = vmatprep.subr.mxu0 0.0
    %1233 = vmatpush1.msra.mxu0 0.0
    %1234 = vmatprep.mubr.f32.mxu0 0.0
    %1235 = vmatmul.mubr.f32.gmra.mrb[0].mxu0 %v953
    %v1236 = vpop.f32.mrb[0].mxu0
    %v1237 = vadd.f32 %v1168, %v1236
    %v1238 = vpop.f32.mrb[0].mxu0
    %1239 = vmatprep.mubr.f32.mxu0 0.0
    %1240 = vmatmul.mubr.f32.gmra.mrb[0].mxu0 %v954
    %v1241 = vpop.f32.mrb[0].mxu0
    %v1242 = vadd.f32 %v1168, %v1241
    %v1243 = vpop.f32.mrb[0].mxu0
    %1244 = vdwg.mxu0
    %v1245 = vld [vmem:[%s12] sm:$0xff]
    %v1246 = vld [vmem:[%s12 + $0x8] sm:$0xff]
    %v1247 = vld [vmem:[%s12 + $0x10] sm:$0xff]
    %v1248 = vld [vmem:[%s12 + $0x18] sm:$0xff]
    %v1249 = vld [vmem:[%s12 + $0x20] sm:$0xff]
    %v1250 = vld [vmem:[%s12 + $0x28] sm:$0xff]
    %v1251 = vld [vmem:[%s12 + $0x30] sm:$0xff]
    %v1252 = vld [vmem:[%s12 + $0x38] sm:$0xff]
    %v1254 = vsel %vm1063, %v1145, 0
    %v1257 = vsel %vm1063, %v1146, 0
    %1259 = vmatprep.subr.mxu0 0.0
    %1260 = vmatpush1.msra.mxu0 %v1245
    %1261 = vmatprep.subr.mxu0 0.0
    %1262 = vmatpush1.msra.mxu0 %v1246
    %1263 = vmatprep.subr.mxu0 0.0
    %1264 = vmatpush1.msra.mxu0 %v1247
    %1265 = vmatprep.subr.mxu0 0.0
    %1266 = vmatpush1.msra.mxu0 %v1248
    %1267 = vmatprep.subr.mxu0 0.0
    %1268 = vmatpush1.msra.mxu0 %v1249
    %1269 = vmatprep.subr.mxu0 0.0
    %1270 = vmatpush1.msra.mxu0 %v1250
    %1271 = vmatprep.subr.mxu0 0.0
    %1272 = vmatpush1.msra.mxu0 %v1251
    %1273 = vmatprep.subr.mxu0 0.0
    %1274 = vmatpush1.msra.mxu0 %v1252
    %1275 = vmatprep.subr.mxu0 0.0
    %1276 = vmatpush1.msra.mxu0 0.0
    %1277 = vmatprep.subr.mxu0 0.0
    %1278 = vmatpush1.msra.mxu0 0.0
    %1279 = vmatprep.subr.mxu0 0.0
    %1280 = vmatpush1.msra.mxu0 0.0
    %1281 = vmatprep.subr.mxu0 0.0
    %1282 = vmatpush1.msra.mxu0 0.0
    %1283 = vmatprep.subr.mxu0 0.0
    %1284 = vmatpush1.msra.mxu0 0.0
    %1285 = vmatprep.subr.mxu0 0.0
    %1286 = vmatpush1.msra.mxu0 0.0
    %1287 = vmatprep.subr.mxu0 0.0
    %1288 = vmatpush1.msra.mxu0 0.0
    %1289 = vmatprep.subr.mxu0 0.0
    %1290 = vmatpush1.msra.mxu0 0.0
    %1291 = vmatprep.subr.mxu0 0.0
    %1292 = vmatpush1.msra.mxu0 0.0
    %1293 = vmatprep.subr.mxu0 0.0
    %1294 = vmatpush1.msra.mxu0 0.0
    %1295 = vmatprep.subr.mxu0 0.0
    %1296 = vmatpush1.msra.mxu0 0.0
    %1297 = vmatprep.subr.mxu0 0.0
    %1298 = vmatpush1.msra.mxu0 0.0
    %1299 = vmatprep.subr.mxu0 0.0
    %1300 = vmatpush1.msra.mxu0 0.0
    %1301 = vmatprep.subr.mxu0 0.0
    %1302 = vmatpush1.msra.mxu0 0.0
    %1303 = vmatprep.subr.mxu0 0.0
    %1304 = vmatpush1.msra.mxu0 0.0
    %1305 = vmatprep.subr.mxu0 0.0
    %1306 = vmatpush1.msra.mxu0 0.0
    %1307 = vmatprep.subr.mxu0 0.0
    %1308 = vmatpush1.msra.mxu0 0.0
    %1309 = vmatprep.subr.mxu0 0.0
    %1310 = vmatpush1.msra.mxu0 0.0
    %1311 = vmatprep.subr.mxu0 0.0
    %1312 = vmatpush1.msra.mxu0 0.0
    %1313 = vmatprep.subr.mxu0 0.0
    %1314 = vmatpush1.msra.mxu0 0.0
    %1315 = vmatprep.subr.mxu0 0.0
    %1316 = vmatpush1.msra.mxu0 0.0
    %1317 = vmatprep.subr.mxu0 0.0
    %1318 = vmatpush1.msra.mxu0 0.0
    %1319 = vmatprep.subr.mxu0 0.0
    %1320 = vmatpush1.msra.mxu0 0.0
    %1321 = vmatprep.subr.mxu0 0.0
    %1322 = vmatpush1.msra.mxu0 0.0
    %1323 = vmatprep.mubr.f32.mxu0 0.0
    %1324 = vmatmul.mubr.f32.gmra.mrb[0].mxu0 %v1254
    %v1325 = vpop.f32.mrb[0].mxu0
    %v1326 = vadd.f32 0.0, %v1325
    %v1327 = vpop.f32.mrb[0].mxu0
    %1328 = vmatprep.mubr.f32.mxu0 0.0
    %1329 = vmatmul.mubr.f32.gmra.mrb[0].mxu0 %v1257
    %v1330 = vpop.f32.mrb[0].mxu0
    %v1331 = vadd.f32 0.0, %v1330
    %v1332 = vpop.f32.mrb[0].mxu0
    %1333 = vdwg.mxu0
    %v1334 = vadd.f32 %v1237, %v1326
    %v1335 = vadd.f32 %v1242, %v1331
    %v1336 = vld [vmem:[%s13] sm:$0x1]
    %v1338 = vlaneseq
    %v1339 = vshrl.u32 %v1338, 7
    %v1340 = vsub.s32 0, %v1339
    %v1341 = vrot.slane %v1336, %v1340
    %v1343 = vadd.f32 %v1334, %v1341
    %v1344 = vadd.f32 %v1335, %v1341
    %vm1345 = vcmask 228352
    %1346 = vst.msk [vmem:[#allocation5] sm:$0xff] %vm1345, %v1343
    %1347 = vst.msk [vmem:[#allocation5 + $0x8] sm:$0xff] %vm1345, %v1344
    // Predicated region
    $region62: #{tpu_custom_call.1} parent=1 // pred_check
      _
    $region63: #{tpu_custom_call.1} parent=1 // pred_check_branch
      %1349 = sbr.rel (0) target = $region65
    $region64: #{tpu_custom_call.1} parent=1 // pred_region
      %s1351 = ssub.s32 256, 256
      %1352 = vsyncadd [#allocation4], %s1351
      %s1353 = sshll.u32 [#allocation5], 4
      %s1354 = int_to_ptr.vmem [resolvable:$true] %s1353
      %1359 = dma.vmem_to_hbm [thread:$0]  %s1354, 256, %s14, [#allocation4], 128, 128, 8
    $region65: #{tpu_custom_call.1} parent=1 // pred_fallthru
      _
    // Predicated region
    $region66: #{tpu_custom_call.1} parent=1 // pred_check
      _
    $region67: #{tpu_custom_call.1} parent=1 // pred_check_branch
      %1361 = sbr.rel (0) target = $region69
    $region68: #{tpu_custom_call.1} parent=1 // pred_region
      %1362 = dma.done [#allocation4], 256
    $region69: #{tpu_custom_call.1} parent=1 // pred_fallthru
      _
    %1363 = vsyncpa [#allocation3], 1
    %1364 = vsyncpa [#allocation4], 1

</llo_original>
